<compile_context>
chip_gen: v6e
topology: v6e:2x2x1
jax: 0.10.0
libtpu: 0.0.40
codegen_flags: <defaults>
</compile_context>

<pallas_src>
import functools

import jax
import jax.numpy as jnp
from jax import lax
from jax.experimental import pallas as pl
from jax.experimental.pallas import tpu as pltpu

BN_EPS = 1e-5


# ----------------------------- Pallas kernel -------------------------------- #

def _banded_conv3x3(src_ref, w_ref, m):
    """3x3 conv as 3 banded matmuls.

    src_ref: (SM, W*Cin) vertically zero-padded, batch-stacked rows (compute dtype).
    w_ref:   (3, W*Cin, W*Cout) per-dy block-tridiagonal band (compute dtype).
    Returns (m, W*Cout) f32 accumulator, m = SM - 2.
    Only sublane(row)-axis slices with full lane width -> no lane relayouts.
    """
    wcout = w_ref.shape[-1]
    acc = jnp.zeros((m, wcout), jnp.float32)
    for dy in range(3):
        acc = acc + jnp.dot(src_ref[dy:dy + m, :], w_ref[dy],
                            preferred_element_type=jnp.float32)
    return acc


def _double_conv_kernel(*refs, NB, H, first_block):
    """Fused conv3x3+BN+ReLU -> conv3x3+BN (+1x1 conv+BN shortcut) -> ReLU.

    Processes NB batch images per grid step, stacked along the matmul M dimension
    with 2 zero rows of vertical padding per image.
    """
    if first_block:
        (x_ref, w1_ref, b1_ref, w2_ref, b2_ref, w3_ref, b3_ref, mask_ref,
         out_ref, xs_ref, hs_ref) = refs
    else:
        (x_ref, w1_ref, b1_ref, w2_ref, b2_ref, mask_ref,
         out_ref, xs_ref, hs_ref) = refs
        w3_ref = b3_ref = None

    SM = NB * (H + 2)
    M = SM - 2
    cdt = xs_ref.dtype
    zrow_x = jnp.zeros((1, xs_ref.shape[1]), cdt)
    zrow_h = jnp.zeros((1, hs_ref.shape[1]), cdt)

    # Stage the NB images into the vertically zero-padded, row-stacked scratch.
    # Border rows are re-zeroed every step (2 rows/image -> trivial) so there is no
    # persistent-scratch init that would break under megacore ("parallel") splitting.
    for n in range(NB):
        base = n * (H + 2)
        xs_ref[base:base + 1, :] = zrow_x
        xs_ref[base + 1:base + 1 + H, :] = x_ref[n]
        xs_ref[base + H + 1:base + H + 2, :] = zrow_x

    # conv1 + folded BN + ReLU.  The mask zeroes the rows sitting at inter-image pad
    # positions so the intermediate keeps exact zero vertical padding.
    h = jnp.maximum(_banded_conv3x3(xs_ref, w1_ref, M) + b1_ref[...], 0.0)
    h = h * mask_ref[...]
    hs_ref[0:1, :] = zrow_h
    hs_ref[SM - 1:SM, :] = zrow_h
    hs_ref[1:SM - 1, :] = h.astype(cdt)

    # conv2 + folded BN (+ 1x1-conv shortcut + folded BN) + final ReLU.
    out = _banded_conv3x3(hs_ref, w2_ref, M) + b2_ref[...]
    if first_block:
        sc = jnp.dot(xs_ref[1:SM - 1, :], w3_ref[...],
                     preferred_element_type=jnp.float32) + b3_ref[...]
        out = out + sc
    out = jnp.maximum(out, 0.0)

    # Extract each image's valid rows into the lane-dense output block.
    for n in range(NB):
        base = n * (H + 2)
        out_ref[n] = out[base:base + H, :].astype(out_ref.dtype)


# ------------------------------ Wrapper ------------------------------------- #

def _const_block_spec(block_shape, index_map):
    """Constant-index blocks (weights/biases/mask): single-buffer them -- the index_map
    never changes across the grid, so double-buffering only wastes VMEM."""
    try:
        return pl.BlockSpec(block_shape, index_map, pipeline_mode=pl.Buffered(1))
    except Exception:  # older jax without pipeline_mode support
        return pl.BlockSpec(block_shape, index_map)


def _pick_batch_tile(n_total, h):
    """Largest divisor of the batch size keeping the stacked matmul M = NB*(H+2) <~ 256."""
    target = max(1, 256 // (h + 2))
    nb = 1
    for d in range(1, n_total + 1):
        if n_total % d == 0 and d <= target:
            nb = d
    return nb


def double_conv_pallas(x_lane, p, *, first_block, batch_tile=None):
    """DoubleConv forward on lane-dense activations.

    x_lane: (N, H, W*Cin)  ->  (N, H, W*Cout).
    Keep activations in this layout between consecutive blocks so no transposes/pads
    are needed around the kernel.
    """
    N, H, WCin = x_lane.shape
    W = int(p["W"])
    Cmid = p["w1_bd"].shape[-1] // W
    Cout = p["w2_bd"].shape[-1] // W
    WCmid, WCout = W * Cmid, W * Cout
    cdt = p["w1_bd"].dtype                        # MXU operand dtype (bf16 by default)

    NB = batch_tile if batch_tile is not None else _pick_batch_tile(N, H)
    assert N % NB == 0
    SM = NB * (H + 2)
    M = SM - 2
    steps = N // NB

    # Valid-row mask for the batch-stacked layout: matmul-result row r maps to stacked
    # position r+1, which is a real image row iff (r+1) mod (H+2) in [1, H].
    pos = jnp.arange(1, SM - 1)
    rel = pos % (H + 2)
    mask = ((rel >= 1) & (rel <= H)).astype(jnp.float32).reshape(M, 1)

    x_c = x_lane.astype(cdt)

    in_specs = [
        pl.BlockSpec((NB, H, WCin), lambda b: (b, 0, 0)),
        _const_block_spec((3, WCin, WCmid), lambda b: (0, 0, 0)),
        _const_block_spec((1, WCmid), lambda b: (0, 0)),
        _const_block_spec((3, WCmid, WCout), lambda b: (0, 0, 0)),
        _const_block_spec((1, WCout), lambda b: (0, 0)),
    ]
    args = [x_c, p["w1_bd"], p["b1_l"], p["w2_bd"], p["b2_l"]]
    if first_block:
        in_specs += [
            _const_block_spec((WCin, WCout), lambda b: (0, 0)),
            _const_block_spec((1, WCout), lambda b: (0, 0)),
        ]
        args += [p["w3_bd"], p["b3_l"]]
    in_specs.append(_const_block_spec((M, 1), lambda b: (0, 0)))
    args.append(mask)

    kern = functools.partial(_double_conv_kernel, NB=NB, H=H, first_block=first_block)

    # Issued MXU FLOPs of the banded formulation (not the "useful" conv FLOPs).
    flops = steps * (2 * 3 * M * WCin * WCmid + 2 * 3 * M * WCmid * WCout)
    if first_block:
        flops += steps * 2 * M * WCin * WCout
    bytes_accessed = sum(int(a.size) * a.dtype.itemsize for a in args)
    bytes_accessed += N * H * WCout * 4

    return pl.pallas_call(
        kern,
        out_shape=jax.ShapeDtypeStruct((N, H, WCout), jnp.float32),
        grid=(steps,),
        in_specs=in_specs,
        out_specs=pl.BlockSpec((NB, H, WCout), lambda b: (b, 0, 0)),
        scratch_shapes=[pltpu.VMEM((SM, WCin), cdt),     # vertically padded input
                        pltpu.VMEM((SM, WCmid), cdt)],   # vertically padded intermediate
        compiler_params=pltpu.CompilerParams(dimension_semantics=("parallel",)),
        cost_estimate=pl.CostEstimate(flops=int(flops), transcendentals=0,
                                      bytes_accessed=int(bytes_accessed)),
    )(*args)


def double_conv_pallas_nchw(x_nchw, p, *, first_block):
    """NCHW adapter (mirrors the PyTorch interface).  Real pipelines should stay in the
    lane-dense (N, H, W*C) layout and call double_conv_pallas directly."""
    N, Cin, H, W = x_nchw.shape
    x_lane = jnp.transpose(x_nchw, (0, 2, 3, 1)).reshape(N, H, W * Cin)
    out_lane = double_conv_pallas(x_lane, p, first_block=first_block)
    Cout = p["w2_bd"].shape[-1] // W
    return jnp.transpose(out_lane.reshape(N, H, W, Cout), (0, 3, 1, 2))


# ------------------------- Parameter construction --------------------------- #

def _fold_conv_bn(w_oihw, b, gamma, beta, mean, var):
    """Fold eval-mode BN into the conv: scale into w, everything else into the bias."""
    scale = gamma / jnp.sqrt(var + BN_EPS)                          # (Cout,)
    w_f = w_oihw * scale[:, None, None, None]
    b_f = beta + scale * (b - mean)
    return w_f, b_f


def _banded_weights(w_f, W):
    """(Cout, Cin, 3, 3) -> (3, W*Cin, W*Cout): per-dy block-tridiagonal band.

    Horizontal zero-padding is folded in by truncating the band at the left/right
    image edges, so activations need no lane padding."""
    Cout, Cin, KH, KW = w_f.shape
    bands = []
    for dy in range(KH):
        band = jnp.zeros((W * Cin, W * Cout), jnp.float32)
        for dx in range(KW):
            # input column wi feeds output column wo iff wi == wo + dx - 1
            eye = jnp.eye(W, k=1 - dx, dtype=jnp.float32)
            band = band + jnp.kron(eye, w_f[:, :, dy, dx].T)
        bands.append(band)
    return jnp.stack(bands, axis=0)


def make_double_conv_params(key, in_channels, out_channels, W, mid_channels=None,
                            first_block=False, compute_dtype=jnp.bfloat16):
    if not mid_channels:
        mid_channels = out_channels
    keys = jax.random.split(key, 9)

    def bn_params(k, c):
        k1, k2, k3, k4 = jax.random.split(k, 4)
        gamma = 1.0 + 0.1 * jax.random.normal(k1, (c,), jnp.float32)
        beta = 0.1 * jax.random.normal(k2, (c,), jnp.float32)
        mean = 0.1 * jax.random.normal(k3, (c,), jnp.float32)
        var = 0.5 + 0.2 * jnp.abs(jax.random.normal(k4, (c,), jnp.float32))
        return gamma, beta, mean, var

    p = {"W": W}
    p["w1"] = 0.1 * jax.random.normal(keys[0], (mid_channels, in_channels, 3, 3), jnp.float32)
    p["b1"] = 0.05 * jax.random.normal(keys[1], (mid_channels,), jnp.float32)
    p["bn1"] = bn_params(keys[2], mid_channels)
    p["w2"] = 0.1 * jax.random.normal(keys[3], (out_channels, mid_channels, 3, 3), jnp.float32)
    p["b2"] = 0.05 * jax.random.normal(keys[4], (out_channels,), jnp.float32)
    p["bn2"] = bn_params(keys[5], out_channels)
    if first_block:
        p["w3"] = 0.1 * jax.random.normal(keys[6], (out_channels, in_channels, 1, 1), jnp.float32)
        p["b3"] = 0.05 * jax.random.normal(keys[7], (out_channels,), jnp.float32)
        p["bn3"] = bn_params(keys[8], out_channels)

    # Pallas-ready folded banded weights (compute dtype) and per-lane f32 biases.
    w1f, b1f = _fold_conv_bn(p["w1"], p["b1"], *p["bn1"])
    p["w1_bd"] = _banded_weights(w1f, W).astype(compute_dtype)      # (3, W*Cin, W*Cmid)
    p["b1_l"] = jnp.tile(b1f, W)[None, :]                           # (1, W*Cmid) f32
    w2f, b2f = _fold_conv_bn(p["w2"], p["b2"], *p["bn2"])
    p["w2_bd"] = _banded_weights(w2f, W).astype(compute_dtype)      # (3, W*Cmid, W*Cout)
    p["b2_l"] = jnp.tile(b2f, W)[None, :]
    if first_block:
        w3f, b3f = _fold_conv_bn(p["w3"], p["b3"], *p["bn3"])
        w3_ic = w3f[:, :, 0, 0].T                                   # (Cin, Cout)
        p["w3_bd"] = jnp.kron(jnp.eye(W, dtype=jnp.float32), w3_ic).astype(compute_dtype)
        p["b3_l"] = jnp.tile(b3f, W)[None, :]
    return p


# ------------------------------ Reference ------------------------------------ #

def double_conv_reference(x, p, *, first_block):
    """Pure-JAX f32 reference (lax.conv, NCHW) mirroring the PyTorch module (eval BN)."""
    def conv_bn(x, w, b, bn, pad):
        y = lax.conv_general_dilated(
            x, w, window_strides=(1, 1), padding=((pad, pad), (pad, pad)),
            dimension_numbers=("NCHW", "OIHW", "NCHW"))
        y = y + b[None, :, None, None]
        gamma, beta, mean, var = bn
        inv = (gamma / jnp.sqrt(var + BN_EPS))[None, :, None, None]
        return (y - mean[None, :, None, None]) * inv + beta[None, :, None, None]

    h1 = jax.nn.relu(conv_bn(x, p["w1"], p["b1"], p["bn1"], 1))
    out = conv_bn(h1, p["w2"], p["b2"], p["bn2"], 1)
    if first_block:
        out = out + conv_bn(x, p["w3"], p["b3"], p["bn3"], 0)
    return jax.nn.relu(out)


# ---------------------------------- Main ------------------------------------- #

if __name__ == "__main__":
    key = jax.random.PRNGKey(0)
    kx, kp1, kp2 = jax.random.split(key, 3)

    N, Cin, H, W, Cout = 2, 4, 16, 16, 8
    x = jax.random.normal(kx, (N, Cin, H, W), jnp.float32)   # NCHW, like PyTorch

    # Default path: bf16 MXU operands, f32 accumulation -> bf16-level tolerance.
    p_fb = make_double_conv_params(kp1, Cin, Cout, W, first_block=True)
    out_fb = double_conv_pallas_nchw(x, p_fb, first_block=True)
    jax.block_until_ready(out_fb)
    ref_fb = double_conv_reference(x, p_fb, first_block=True)
    assert out_fb.shape == (N, Cout, H, W)
    assert jnp.allclose(out_fb, ref_fb, atol=5e-2, rtol=5e-2), (
        "first_block (bf16) mismatch", float(jnp.max(jnp.abs(out_fb - ref_fb))))

    p_nf = make_double_conv_params(kp2, Cin, Cout, W, first_block=False)
    out_nf = double_conv_pallas_nchw(x, p_nf, first_block=False)
    jax.block_until_ready(out_nf)
    ref_nf = double_conv_reference(x, p_nf, first_block=False)
    assert jnp.allclose(out_nf, ref_nf, atol=5e-2, rtol=5e-2), (
        "no-shortcut (bf16) mismatch", float(jnp.max(jnp.abs(out_nf - ref_nf))))

    # f32 MXU operands: tight check that the banded / batch-stacked formulation
    # (padding folding, masks, row extraction) is exact.
    p32 = make_double_conv_params(kp1, Cin, Cout, W, first_block=True,
                                  compute_dtype=jnp.float32)
    out32 = double_conv_pallas_nchw(x, p32, first_block=True)
    jax.block_until_ready(out32)
    ref32 = double_conv_reference(x, p32, first_block=True)
    assert jnp.allclose(out32, ref32, atol=1e-4, rtol=1e-4), (
        "f32 exactness mismatch", float(jnp.max(jnp.abs(out32 - ref32))))

    print("KERNEL_OK")
</pallas_src>

<mosaic_0001>
module attributes {stable_mosaic.version = 11 : i64} {
  func.func @_double_conv_kernel(%arg0: i32, %arg1: memref<2x16x64xbf16, #tpu.memory_space<vmem>>, %arg2: memref<3x64x128xbf16, #tpu.memory_space<vmem>>, %arg3: memref<1x128xf32, #tpu.memory_space<vmem>>, %arg4: memref<3x128x128xbf16, #tpu.memory_space<vmem>>, %arg5: memref<1x128xf32, #tpu.memory_space<vmem>>, %arg6: memref<64x128xbf16, #tpu.memory_space<vmem>>, %arg7: memref<1x128xf32, #tpu.memory_space<vmem>>, %arg8: memref<34x1xf32, #tpu.memory_space<vmem>>, %arg9: memref<2x16x128xf32, #tpu.memory_space<vmem>>, %arg10: memref<36x64xbf16, #tpu.memory_space<vmem>>, %arg11: memref<36x128xbf16, #tpu.memory_space<vmem>>) attributes {dimension_semantics = [#tpu.dimension_semantics<parallel>], iteration_bounds = array<i64: 1>, scalar_prefetch = 0 : i64, scratch_operands = 2 : i64, tpu.core_type = #tpu.core_type<tc>, window_params = [{transform_indices = @transform_0, window_bounds = array<i64: 2, 16, 64>}, {pipeline_mode = #tpu.pipeline_mode<synchronous>, transform_indices = @transform_1, window_bounds = array<i64: 3, 64, 128>}, {pipeline_mode = #tpu.pipeline_mode<synchronous>, transform_indices = @transform_2, window_bounds = array<i64: 1, 128>}, {pipeline_mode = #tpu.pipeline_mode<synchronous>, transform_indices = @transform_3, window_bounds = array<i64: 3, 128, 128>}, {pipeline_mode = #tpu.pipeline_mode<synchronous>, transform_indices = @transform_4, window_bounds = array<i64: 1, 128>}, {pipeline_mode = #tpu.pipeline_mode<synchronous>, transform_indices = @transform_5, window_bounds = array<i64: 64, 128>}, {pipeline_mode = #tpu.pipeline_mode<synchronous>, transform_indices = @transform_6, window_bounds = array<i64: 1, 128>}, {pipeline_mode = #tpu.pipeline_mode<synchronous>, transform_indices = @transform_7, window_bounds = array<i64: 34, 1>}, {transform_indices = @transform_8, window_bounds = array<i64: 2, 16, 128>}]} {
    %cst = arith.constant 0.000000e+00 : bf16
    %0 = vector.broadcast %cst : bf16 to vector<1x64xbf16>
    %cst_0 = arith.constant 0.000000e+00 : bf16
    %1 = vector.broadcast %cst_0 : bf16 to vector<1x128xbf16>
    %c0 = arith.constant 0 : index
    %c0_1 = arith.constant 0 : index
    %2 = vector.load %arg10[%c0, %c0_1] : memref<36x64xbf16, #tpu.memory_space<vmem>>, vector<1x64xbf16>
    tpu.vector_store %arg10[%c0, %c0_1], %0 {strides = array<i32>} : memref<36x64xbf16, #tpu.memory_space<vmem>>, vector<1x64xbf16>,
    %c0_2 = arith.constant 0 : index
    %c0_3 = arith.constant 0 : index
    %c0_4 = arith.constant 0 : index
    %3 = vector.load %arg1[%c0_2, %c0_3, %c0_4] : memref<2x16x64xbf16, #tpu.memory_space<vmem>>, vector<1x16x64xbf16>
    %4 = vector.shape_cast %3 : vector<1x16x64xbf16> to vector<16x64xbf16>
    %c1 = arith.constant 1 : index
    %c0_5 = arith.constant 0 : index
    %5 = vector.load %arg10[%c1, %c0_5] : memref<36x64xbf16, #tpu.memory_space<vmem>>, vector<16x64xbf16>
    tpu.vector_store %arg10[%c1, %c0_5], %4 {strides = array<i32>} : memref<36x64xbf16, #tpu.memory_space<vmem>>, vector<16x64xbf16>,
    %c17 = arith.constant 17 : index
    %c0_6 = arith.constant 0 : index
    %6 = vector.load %arg10[%c17, %c0_6] : memref<36x64xbf16, #tpu.memory_space<vmem>>, vector<1x64xbf16>
    tpu.vector_store %arg10[%c17, %c0_6], %0 {strides = array<i32>} : memref<36x64xbf16, #tpu.memory_space<vmem>>, vector<1x64xbf16>,
    %c18 = arith.constant 18 : index
    %c0_7 = arith.constant 0 : index
    %7 = vector.load %arg10[%c18, %c0_7] : memref<36x64xbf16, #tpu.memory_space<vmem>>, vector<1x64xbf16>
    tpu.vector_store %arg10[%c18, %c0_7], %0 {strides = array<i32>} : memref<36x64xbf16, #tpu.memory_space<vmem>>, vector<1x64xbf16>,
    %c1_8 = arith.constant 1 : index
    %c0_9 = arith.constant 0 : index
    %c0_10 = arith.constant 0 : index
    %8 = vector.load %arg1[%c1_8, %c0_9, %c0_10] : memref<2x16x64xbf16, #tpu.memory_space<vmem>>, vector<1x16x64xbf16>
    %9 = vector.shape_cast %8 : vector<1x16x64xbf16> to vector<16x64xbf16>
    %c19 = arith.constant 19 : index
    %c0_11 = arith.constant 0 : index
    %10 = vector.load %arg10[%c19, %c0_11] : memref<36x64xbf16, #tpu.memory_space<vmem>>, vector<16x64xbf16>
    tpu.vector_store %arg10[%c19, %c0_11], %9 {strides = array<i32>} : memref<36x64xbf16, #tpu.memory_space<vmem>>, vector<16x64xbf16>,
    %c35 = arith.constant 35 : index
    %c0_12 = arith.constant 0 : index
    %11 = vector.load %arg10[%c35, %c0_12] : memref<36x64xbf16, #tpu.memory_space<vmem>>, vector<1x64xbf16>
    tpu.vector_store %arg10[%c35, %c0_12], %0 {strides = array<i32>} : memref<36x64xbf16, #tpu.memory_space<vmem>>, vector<1x64xbf16>,
    %cst_13 = arith.constant 0.000000e+00 : f32
    %12 = vector.broadcast %cst_13 : f32 to vector<34x128xf32>
    %c0_14 = arith.constant 0 : index
    %c0_15 = arith.constant 0 : index
    %13 = vector.load %arg10[%c0_14, %c0_15] : memref<36x64xbf16, #tpu.memory_space<vmem>>, vector<34x64xbf16>
    %c0_16 = arith.constant 0 : index
    %c0_17 = arith.constant 0 : index
    %c0_18 = arith.constant 0 : index
    %14 = vector.load %arg2[%c0_16, %c0_17, %c0_18] : memref<3x64x128xbf16, #tpu.memory_space<vmem>>, vector<1x64x128xbf16>
    %15 = vector.shape_cast %14 : vector<1x64x128xbf16> to vector<64x128xbf16>
    %cst_19 = arith.constant dense<0.000000e+00> : vector<34x128xf32>
    %16 = tpu.matmul %13, %15, %cst_19 {dimension_numbers = #tpu.dot_dimension_numbers<[1], [0], [0], [1], [0, 0, 1, 1], [], []>} : vector<34x64xbf16>, vector<64x128xbf16>, vector<34x128xf32> -> vector<34x128xf32>
    %17 = arith.addf %12, %16 : vector<34x128xf32>
    %c1_20 = arith.constant 1 : index
    %c0_21 = arith.constant 0 : index
    %18 = vector.load %arg10[%c1_20, %c0_21] : memref<36x64xbf16, #tpu.memory_space<vmem>>, vector<34x64xbf16>
    %c1_22 = arith.constant 1 : index
    %c0_23 = arith.constant 0 : index
    %c0_24 = arith.constant 0 : index
    %19 = vector.load %arg2[%c1_22, %c0_23, %c0_24] : memref<3x64x128xbf16, #tpu.memory_space<vmem>>, vector<1x64x128xbf16>
    %20 = vector.shape_cast %19 : vector<1x64x128xbf16> to vector<64x128xbf16>
    %cst_25 = arith.constant dense<0.000000e+00> : vector<34x128xf32>
    %21 = tpu.matmul %18, %20, %cst_25 {dimension_numbers = #tpu.dot_dimension_numbers<[1], [0], [0], [1], [0, 0, 1, 1], [], []>} : vector<34x64xbf16>, vector<64x128xbf16>, vector<34x128xf32> -> vector<34x128xf32>
    %22 = arith.addf %17, %21 : vector<34x128xf32>
    %c2 = arith.constant 2 : index
    %c0_26 = arith.constant 0 : index
    %23 = vector.load %arg10[%c2, %c0_26] : memref<36x64xbf16, #tpu.memory_space<vmem>>, vector<34x64xbf16>
    %c2_27 = arith.constant 2 : index
    %c0_28 = arith.constant 0 : index
    %c0_29 = arith.constant 0 : index
    %24 = vector.load %arg2[%c2_27, %c0_28, %c0_29] : memref<3x64x128xbf16, #tpu.memory_space<vmem>>, vector<1x64x128xbf16>
    %25 = vector.shape_cast %24 : vector<1x64x128xbf16> to vector<64x128xbf16>
    %cst_30 = arith.constant dense<0.000000e+00> : vector<34x128xf32>
    %26 = tpu.matmul %23, %25, %cst_30 {dimension_numbers = #tpu.dot_dimension_numbers<[1], [0], [0], [1], [0, 0, 1, 1], [], []>} : vector<34x64xbf16>, vector<64x128xbf16>, vector<34x128xf32> -> vector<34x128xf32>
    %27 = arith.addf %22, %26 : vector<34x128xf32>
    %c0_31 = arith.constant 0 : index
    %c0_32 = arith.constant 0 : index
    %28 = vector.load %arg3[%c0_31, %c0_32] : memref<1x128xf32, #tpu.memory_space<vmem>>, vector<1x128xf32>
    %29 = vector.broadcast %28 : vector<1x128xf32> to vector<34x128xf32>
    %30 = arith.addf %27, %29 : vector<34x128xf32>
    %cst_33 = arith.constant 0.000000e+00 : f32
    %31 = vector.broadcast %cst_33 : f32 to vector<34x128xf32>
    %32 = arith.maximumf %30, %31 : vector<34x128xf32>
    %c0_34 = arith.constant 0 : index
    %c0_35 = arith.constant 0 : index
    %33 = vector.load %arg8[%c0_34, %c0_35] : memref<34x1xf32, #tpu.memory_space<vmem>>, vector<34x1xf32>
    %34 = vector.broadcast %33 : vector<34x1xf32> to vector<34x128xf32>
    %35 = arith.mulf %32, %34 : vector<34x128xf32>
    %c0_36 = arith.constant 0 : index
    %c0_37 = arith.constant 0 : index
    %36 = vector.load %arg11[%c0_36, %c0_37] : memref<36x128xbf16, #tpu.memory_space<vmem>>, vector<1x128xbf16>
    tpu.vector_store %arg11[%c0_36, %c0_37], %1 {strides = array<i32>} : memref<36x128xbf16, #tpu.memory_space<vmem>>, vector<1x128xbf16>,
    %c35_38 = arith.constant 35 : index
    %c0_39 = arith.constant 0 : index
    %37 = vector.load %arg11[%c35_38, %c0_39] : memref<36x128xbf16, #tpu.memory_space<vmem>>, vector<1x128xbf16>
    tpu.vector_store %arg11[%c35_38, %c0_39], %1 {strides = array<i32>} : memref<36x128xbf16, #tpu.memory_space<vmem>>, vector<1x128xbf16>,
    %38 = arith.truncf %35 : vector<34x128xf32> to vector<34x128xbf16>
    %c1_40 = arith.constant 1 : index
    %c0_41 = arith.constant 0 : index
    %39 = vector.load %arg11[%c1_40, %c0_41] : memref<36x128xbf16, #tpu.memory_space<vmem>>, vector<34x128xbf16>
    tpu.vector_store %arg11[%c1_40, %c0_41], %38 {strides = array<i32>} : memref<36x128xbf16, #tpu.memory_space<vmem>>, vector<34x128xbf16>,
    %cst_42 = arith.constant 0.000000e+00 : f32
    %40 = vector.broadcast %cst_42 : f32 to vector<34x128xf32>
    %c0_43 = arith.constant 0 : index
    %c0_44 = arith.constant 0 : index
    %41 = vector.load %arg11[%c0_43, %c0_44] : memref<36x128xbf16, #tpu.memory_space<vmem>>, vector<34x128xbf16>
    %c0_45 = arith.constant 0 : index
    %c0_46 = arith.constant 0 : index
    %c0_47 = arith.constant 0 : index
    %42 = vector.load %arg4[%c0_45, %c0_46, %c0_47] : memref<3x128x128xbf16, #tpu.memory_space<vmem>>, vector<1x128x128xbf16>
    %43 = vector.shape_cast %42 : vector<1x128x128xbf16> to vector<128x128xbf16>
    %cst_48 = arith.constant dense<0.000000e+00> : vector<34x128xf32>
    %44 = tpu.matmul %41, %43, %cst_48 {dimension_numbers = #tpu.dot_dimension_numbers<[1], [0], [0], [1], [0, 0, 1, 1], [], []>} : vector<34x128xbf16>, vector<128x128xbf16>, vector<34x128xf32> -> vector<34x128xf32>
    %45 = arith.addf %40, %44 : vector<34x128xf32>
    %c1_49 = arith.constant 1 : index
    %c0_50 = arith.constant 0 : index
    %46 = vector.load %arg11[%c1_49, %c0_50] : memref<36x128xbf16, #tpu.memory_space<vmem>>, vector<34x128xbf16>
    %c1_51 = arith.constant 1 : index
    %c0_52 = arith.constant 0 : index
    %c0_53 = arith.constant 0 : index
    %47 = vector.load %arg4[%c1_51, %c0_52, %c0_53] : memref<3x128x128xbf16, #tpu.memory_space<vmem>>, vector<1x128x128xbf16>
    %48 = vector.shape_cast %47 : vector<1x128x128xbf16> to vector<128x128xbf16>
    %cst_54 = arith.constant dense<0.000000e+00> : vector<34x128xf32>
    %49 = tpu.matmul %46, %48, %cst_54 {dimension_numbers = #tpu.dot_dimension_numbers<[1], [0], [0], [1], [0, 0, 1, 1], [], []>} : vector<34x128xbf16>, vector<128x128xbf16>, vector<34x128xf32> -> vector<34x128xf32>
    %50 = arith.addf %45, %49 : vector<34x128xf32>
    %c2_55 = arith.constant 2 : index
    %c0_56 = arith.constant 0 : index
    %51 = vector.load %arg11[%c2_55, %c0_56] : memref<36x128xbf16, #tpu.memory_space<vmem>>, vector<34x128xbf16>
    %c2_57 = arith.constant 2 : index
    %c0_58 = arith.constant 0 : index
    %c0_59 = arith.constant 0 : index
    %52 = vector.load %arg4[%c2_57, %c0_58, %c0_59] : memref<3x128x128xbf16, #tpu.memory_space<vmem>>, vector<1x128x128xbf16>
    %53 = vector.shape_cast %52 : vector<1x128x128xbf16> to vector<128x128xbf16>
    %cst_60 = arith.constant dense<0.000000e+00> : vector<34x128xf32>
    %54 = tpu.matmul %51, %53, %cst_60 {dimension_numbers = #tpu.dot_dimension_numbers<[1], [0], [0], [1], [0, 0, 1, 1], [], []>} : vector<34x128xbf16>, vector<128x128xbf16>, vector<34x128xf32> -> vector<34x128xf32>
    %55 = arith.addf %50, %54 : vector<34x128xf32>
    %c0_61 = arith.constant 0 : index
    %c0_62 = arith.constant 0 : index
    %56 = vector.load %arg5[%c0_61, %c0_62] : memref<1x128xf32, #tpu.memory_space<vmem>>, vector<1x128xf32>
    %57 = vector.broadcast %56 : vector<1x128xf32> to vector<34x128xf32>
    %58 = arith.addf %55, %57 : vector<34x128xf32>
    %c1_63 = arith.constant 1 : index
    %c0_64 = arith.constant 0 : index
    %59 = vector.load %arg10[%c1_63, %c0_64] : memref<36x64xbf16, #tpu.memory_space<vmem>>, vector<34x64xbf16>
    %c0_65 = arith.constant 0 : index
    %c0_66 = arith.constant 0 : index
    %60 = vector.load %arg6[%c0_65, %c0_66] : memref<64x128xbf16, #tpu.memory_space<vmem>>, vector<64x128xbf16>
    %cst_67 = arith.constant dense<0.000000e+00> : vector<34x128xf32>
    %61 = tpu.matmul %59, %60, %cst_67 {dimension_numbers = #tpu.dot_dimension_numbers<[1], [0], [0], [1], [0, 0, 1, 1], [], []>} : vector<34x64xbf16>, vector<64x128xbf16>, vector<34x128xf32> -> vector<34x128xf32>
    %c0_68 = arith.constant 0 : index
    %c0_69 = arith.constant 0 : index
    %62 = vector.load %arg7[%c0_68, %c0_69] : memref<1x128xf32, #tpu.memory_space<vmem>>, vector<1x128xf32>
    %63 = vector.broadcast %62 : vector<1x128xf32> to vector<34x128xf32>
    %64 = arith.addf %61, %63 : vector<34x128xf32>
    %65 = arith.addf %58, %64 : vector<34x128xf32>
    %cst_70 = arith.constant 0.000000e+00 : f32
    %66 = vector.broadcast %cst_70 : f32 to vector<34x128xf32>
    %67 = arith.maximumf %65, %66 : vector<34x128xf32>
    %68 = vector.extract_strided_slice %67 {offsets = [0, 0], sizes = [16, 128], strides = [1, 1]} : vector<34x128xf32> to vector<16x128xf32>
    %c0_71 = arith.constant 0 : index
    %c0_72 = arith.constant 0 : index
    %c0_73 = arith.constant 0 : index
    %69 = vector.load %arg9[%c0_71, %c0_72, %c0_73] : memref<2x16x128xf32, #tpu.memory_space<vmem>>, vector<1x16x128xf32>
    %70 = vector.shape_cast %69 : vector<1x16x128xf32> to vector<16x128xf32>
    %71 = vector.shape_cast %68 : vector<16x128xf32> to vector<1x16x128xf32>
    tpu.vector_store %arg9[%c0_71, %c0_72, %c0_73], %71 {strides = array<i32>} : memref<2x16x128xf32, #tpu.memory_space<vmem>>, vector<1x16x128xf32>,
    %72 = vector.extract_strided_slice %67 {offsets = [18, 0], sizes = [16, 128], strides = [1, 1]} : vector<34x128xf32> to vector<16x128xf32>
    %c1_74 = arith.constant 1 : index
    %c0_75 = arith.constant 0 : index
    %c0_76 = arith.constant 0 : index
    %73 = vector.load %arg9[%c1_74, %c0_75, %c0_76] : memref<2x16x128xf32, #tpu.memory_space<vmem>>, vector<1x16x128xf32>
    %74 = vector.shape_cast %73 : vector<1x16x128xf32> to vector<16x128xf32>
    %75 = vector.shape_cast %72 : vector<16x128xf32> to vector<1x16x128xf32>
    tpu.vector_store %arg9[%c1_74, %c0_75, %c0_76], %75 {strides = array<i32>} : memref<2x16x128xf32, #tpu.memory_space<vmem>>, vector<1x16x128xf32>,
    return
  }
  func.func @transform_0(%arg0: i32) -> (i32, i32, i32) {
    %c0_i32 = arith.constant 0 : i32
    %c0_i32_0 = arith.constant 0 : i32
    %c0_i32_1 = arith.constant 0 : i32
    return %arg0, %c0_i32, %c0_i32_0 : i32, i32, i32
  }
  func.func @transform_1(%arg0: i32) -> (i32, i32, i32) {
    %c0_i32 = arith.constant 0 : i32
    %c0_i32_0 = arith.constant 0 : i32
    %c0_i32_1 = arith.constant 0 : i32
    %c0_i32_2 = arith.constant 0 : i32
    return %c0_i32, %c0_i32_0, %c0_i32_1 : i32, i32, i32
  }
  func.func @transform_2(%arg0: i32) -> (i32, i32) {
    %c0_i32 = arith.constant 0 : i32
    %c0_i32_0 = arith.constant 0 : i32
    %c0_i32_1 = arith.constant 0 : i32
    return %c0_i32, %c0_i32_0 : i32, i32
  }
  func.func @transform_3(%arg0: i32) -> (i32, i32, i32) {
    %c0_i32 = arith.constant 0 : i32
    %c0_i32_0 = arith.constant 0 : i32
    %c0_i32_1 = arith.constant 0 : i32
    %c0_i32_2 = arith.constant 0 : i32
    return %c0_i32, %c0_i32_0, %c0_i32_1 : i32, i32, i32
  }
  func.func @transform_4(%arg0: i32) -> (i32, i32) {
    %c0_i32 = arith.constant 0 : i32
    %c0_i32_0 = arith.constant 0 : i32
    %c0_i32_1 = arith.constant 0 : i32
    return %c0_i32, %c0_i32_0 : i32, i32
  }
  func.func @transform_5(%arg0: i32) -> (i32, i32) {
    %c0_i32 = arith.constant 0 : i32
    %c0_i32_0 = arith.constant 0 : i32
    %c0_i32_1 = arith.constant 0 : i32
    return %c0_i32, %c0_i32_0 : i32, i32
  }
  func.func @transform_6(%arg0: i32) -> (i32, i32) {
    %c0_i32 = arith.constant 0 : i32
    %c0_i32_0 = arith.constant 0 : i32
    %c0_i32_1 = arith.constant 0 : i32
    return %c0_i32, %c0_i32_0 : i32, i32
  }
  func.func @transform_7(%arg0: i32) -> (i32, i32) {
    %c0_i32 = arith.constant 0 : i32
    %c0_i32_0 = arith.constant 0 : i32
    %c0_i32_1 = arith.constant 0 : i32
    return %c0_i32, %c0_i32_0 : i32, i32
  }
  func.func @transform_8(%arg0: i32) -> (i32, i32, i32) {
    %c0_i32 = arith.constant 0 : i32
    %c0_i32_0 = arith.constant 0 : i32
    %c0_i32_1 = arith.constant 0 : i32
    return %arg0, %c0_i32, %c0_i32_0 : i32, i32, i32
  }
}

</mosaic_0001>

<llo_original>
// kernel: tpu_custom_call.1
$region0: #{tpu_custom_call.1}
  #allocation0 [shape = 'u32[]', space=smem, size = 0x4, offset = 0x4, fixed_abs, tag = 'smem constant byte address 0x4 - core index']
  #allocation1 [shape = 'u32[144,128]{1,0:T(1,128)}', space=vmem, size = 0x12000, scoped, tag = 'internal scratch']
  #allocation2 [shape = 'bf16[36,64]{1,0:T(8,128)(2,1)}', space=vmem, size = 0x2800, scoped, tag = 'scratch operand']
  #allocation3 [shape = 'bf16[36,128]{1,0:T(8,128)(2,1)}', space=vmem, size = 0x2800, scoped, tag = 'scratch operand']
  %s0 = inlined_call_operand.vmem [shape: bf16[2,16,64], index: 0, kind: input, shape index: {}]
  %s1 = inlined_call_operand.hbm [shape: bf16[3,64,128], index: 1, kind: input, shape index: {}]
  %s2 = inlined_call_operand.vmem [shape: f32[1,128], index: 2, kind: input, shape index: {}]
  %s3 = inlined_call_operand.hbm [shape: bf16[3,128,128], index: 3, kind: input, shape index: {}]
  %s4 = inlined_call_operand.vmem [shape: f32[1,128], index: 4, kind: input, shape index: {}]
  %s5 = inlined_call_operand.vmem [shape: bf16[64,128], index: 5, kind: input, shape index: {}]
  %s6 = inlined_call_operand.vmem [shape: f32[1,128], index: 6, kind: input, shape index: {}]
  %s7 = inlined_call_operand.vmem [shape: f32[34,1], index: 7, kind: input, shape index: {}]
  %s8 = inlined_call_operand.hbm [shape: f32[2,16,128], index: 8, kind: output, shape index: {}]
  %s9 = sld [smem:[#allocation0]]
  $region50: #{tpu_custom_call.1} parent=0
    _
  %s11 = ssub.s32 1, %s9
  %s12 = scalar_select 0, %s11, %s9
  $region1: #{tpu_custom_call.1} parent=0
    #allocation4 [shape = 'u8[49152]{0}', space=vmem, size = 0xc000, scoped, tag = 'input window, operand 1, single buffered']
    #allocation5 [shape = 's32[1]{0}', space=sflag, size = 0x4, scoped, tag = 'scoped memory for tpu_custom_call.1']
    #allocation6 [shape = 's32[1]{0}', space=sflag, size = 0x4, scoped, tag = 'scoped memory for tpu_custom_call.1']
    #allocation7 [shape = 'u8[98304]{0}', space=vmem, size = 0x18000, scoped, tag = 'input window, operand 3, single buffered']
    #allocation8 [shape = 's32[1]{0}', space=sflag, size = 0x4, scoped, tag = 'scoped memory for tpu_custom_call.1']
    #allocation9 [shape = 'u8[16384]{0}', space=vmem, size = 0x4000, scoped, tag = 'output window, operand 0, single buffered']
    %13 = vsyncpa [#allocation5], 0
    %14 = vsyncpa [#allocation8], 0
    %15 = vsyncpa [#allocation6], 0
    // Predicated region
    $region2: #{tpu_custom_call.1} parent=1 // pred_check
      _
    $region3: #{tpu_custom_call.1} parent=1 // pred_check_branch
      %17 = sbr.rel (0) target = $region5
    $region4: #{tpu_custom_call.1} parent=1 // pred_region
      _
    $region5: #{tpu_custom_call.1} parent=1 // pred_fallthru
      _
    // Predicated region
    $region6: #{tpu_custom_call.1} parent=1 // pred_check
      _
    $region7: #{tpu_custom_call.1} parent=1 // pred_check_branch
      %19 = sbr.rel (0) target = $region9
    $region8: #{tpu_custom_call.1} parent=1 // pred_region
      %s21 = ssub.s32 1536, 1536
      %22 = vsyncadd [#allocation5], %s21
      %s23 = sshll.u32 [#allocation4], 4
      %s24 = int_to_ptr.vmem [resolvable:$true] %s23
      %29 = dma.hbm_to_vmem [thread:$0]  %s1, 1536, %s24, [#allocation5], 64, 64, 4
    $region9: #{tpu_custom_call.1} parent=1 // pred_fallthru
      _
    // Predicated region
    $region10: #{tpu_custom_call.1} parent=1 // pred_check
      _
    $region11: #{tpu_custom_call.1} parent=1 // pred_check_branch
      %31 = sbr.rel (0) target = $region13
    $region12: #{tpu_custom_call.1} parent=1 // pred_region
      _
    $region13: #{tpu_custom_call.1} parent=1 // pred_fallthru
      _
    // Predicated region
    $region14: #{tpu_custom_call.1} parent=1 // pred_check
      _
    $region15: #{tpu_custom_call.1} parent=1 // pred_check_branch
      %33 = sbr.rel (0) target = $region17
    $region16: #{tpu_custom_call.1} parent=1 // pred_region
      %s35 = ssub.s32 3072, 3072
      %36 = vsyncadd [#allocation8], %s35
      %s37 = sshll.u32 [#allocation7], 4
      %s38 = int_to_ptr.vmem [resolvable:$true] %s37
      %43 = dma.hbm_to_vmem [thread:$0]  %s3, 3072, %s38, [#allocation8], 64, 64, 4
    $region17: #{tpu_custom_call.1} parent=1 // pred_fallthru
      _
    // Predicated region
    $region18: #{tpu_custom_call.1} parent=1 // pred_check
      _
    $region19: #{tpu_custom_call.1} parent=1 // pred_check_branch
      %45 = sbr.rel (0) target = $region21
    $region20: #{tpu_custom_call.1} parent=1 // pred_region
      _
    $region21: #{tpu_custom_call.1} parent=1 // pred_fallthru
      _
    // Predicated region
    $region22: #{tpu_custom_call.1} parent=1 // pred_check
      _
    $region23: #{tpu_custom_call.1} parent=1 // pred_check_branch
      %47 = sbr.rel (0) target = $region25
    $region24: #{tpu_custom_call.1} parent=1 // pred_region
      _
    $region25: #{tpu_custom_call.1} parent=1 // pred_fallthru
      _
    // Predicated region
    $region26: #{tpu_custom_call.1} parent=1 // pred_check
      _
    $region27: #{tpu_custom_call.1} parent=1 // pred_check_branch
      %49 = sbr.rel (0) target = $region29
    $region28: #{tpu_custom_call.1} parent=1 // pred_region
      _
    $region29: #{tpu_custom_call.1} parent=1 // pred_fallthru
      _
    // Predicated region
    $region30: #{tpu_custom_call.1} parent=1 // pred_check
      _
    $region31: #{tpu_custom_call.1} parent=1 // pred_check_branch
      %51 = sbr.rel (0) target = $region33
    $region32: #{tpu_custom_call.1} parent=1 // pred_region
      _
    $region33: #{tpu_custom_call.1} parent=1 // pred_fallthru
      _
    // Predicated region
    $region34: #{tpu_custom_call.1} parent=1 // pred_check
      _
    $region35: #{tpu_custom_call.1} parent=1 // pred_check_branch
      %53 = sbr.rel (0) target = $region37
    $region36: #{tpu_custom_call.1} parent=1 // pred_region
      %54 = dma.done [#allocation5], 1536
    $region37: #{tpu_custom_call.1} parent=1 // pred_fallthru
      _
    // Predicated region
    $region38: #{tpu_custom_call.1} parent=1 // pred_check
      _
    $region39: #{tpu_custom_call.1} parent=1 // pred_check_branch
      %56 = sbr.rel (0) target = $region41
    $region40: #{tpu_custom_call.1} parent=1 // pred_region
      %57 = dma.done [#allocation8], 3072
    $region41: #{tpu_custom_call.1} parent=1 // pred_fallthru
      _
    %vm59 = vcmask 516096
    %vm60 = vsmask.f32 256
    %vm61 = vmand %vm59, %vm60
    %v62 = vld [vmem:[#allocation2] sm:$0x1]
    %v63 = vsel %vm61, 0, %v62
    %64 = vst [vmem:[#allocation2] sm:$0x1] %v63
    %v65 = vld [vmem:[%s0] sm:$0xf]
    %v66 = vld [vmem:[%s0 + $0x4] sm:$0xf]
    %vm67 = vsmask.f32 4368
    %vm68 = vmor %vm60, %vm67
    %v70 = vshrl.u32 %v65, 16
    %v72 = vrot.slane %v70, 7
    %v73 = vshll.u32 %v65, 16
    %v75 = vor.u32 %v72, %v73
    %v76 = vrot.slane %v72, 4
    %v78 = vshrl.u32 %v66, 16
    %v80 = vrot.slane %v78, 7
    %v81 = vshll.u32 %v66, 16
    %v83 = vor.u32 %v80, %v81
    %v84 = vsel %vm68, %v76, %v83
    %v85 = vrot.slane %v80, 4
    %vm89 = vcmask 519168
    %vm90 = vsmask.f32 7938
    %vm91 = vmand %vm89, %vm90
    %v92 = vld [vmem:[#allocation2] sm:$0xf]
    %v93 = vsel %vm91, %v75, %v92
    %94 = vst [vmem:[#allocation2] sm:$0xf] %v93
    %vm95 = vcmask 519168
    %96 = vst.msk [vmem:[#allocation2 + $0x4] sm:$0xf] %vm95, %v84
    %v97 = vld [vmem:[#allocation2 + $0x8] sm:$0x1]
    %v98 = vsel %vm61, %v85, %v97
    %99 = vst [vmem:[#allocation2 + $0x8] sm:$0x1] %v98
    %vm100 = vmand %vm59, %vm90
    %v101 = vld [vmem:[#allocation2 + $0x8] sm:$0x1]
    %v102 = vsel %vm100, 0, %v101
    %103 = vst [vmem:[#allocation2 + $0x8] sm:$0x1] %v102
    %vm104 = vcmask 517121
    %vm105 = vsmask.f32 1280
    %vm106 = vmand %vm104, %vm105
    %v107 = vld [vmem:[#allocation2 + $0x8] sm:$0x2]
    %v108 = vsel %vm106, 0, %v107
    %109 = vst [vmem:[#allocation2 + $0x8] sm:$0x2] %v108
    %s110 = scalar_lea.vmem %s0, 8
    %v111 = vld [vmem:[%s110] sm:$0xf]
    %v112 = vld [vmem:[%s110 + $0x4] sm:$0xf]
    %vm113 = vsmask.f32 5392
    %vm114 = vmor %vm105, %vm113
    %v116 = vshrl.u32 %v111, 16
    %v118 = vrot.slane %v116, 6
    %v119 = vshll.u32 %v111, 16
    %v121 = vrot.slane %v119, 7
    %v122 = vor.u32 %v118, %v121
    %v123 = vrot.slane %v122, 4
    %v125 = vshrl.u32 %v112, 16
    %v127 = vrot.slane %v125, 6
    %v128 = vshll.u32 %v112, 16
    %v130 = vrot.slane %v128, 7
    %v131 = vor.u32 %v127, %v130
    %v132 = vsel %vm114, %v123, %v131
    %v133 = vrot.slane %v131, 4
    %vm137 = vcmask 519169
    %vm138 = vsmask.f32 7942
    %vm139 = vmand %vm137, %vm138
    %v140 = vld [vmem:[#allocation2 + $0x8] sm:$0xe]
    %v141 = vsel %vm139, %v122, %v140
    %142 = vst [vmem:[#allocation2 + $0x8] sm:$0xe] %v141
    %143 = vst.msk [vmem:[#allocation2 + $0xc] sm:$0xf] %vm95, %v132
    %vm144 = vcmask 517120
    %vm145 = vmand %vm144, %vm105
    %v146 = vld [vmem:[#allocation2 + $0x10] sm:$0x3]
    %v147 = vsel %vm145, %v133, %v146
    %148 = vst [vmem:[#allocation2 + $0x10] sm:$0x3] %v147
    %vm149 = vmand %vm104, %vm138
    %v150 = vld [vmem:[#allocation2 + $0x10] sm:$0x2]
    %v151 = vsel %vm149, 0, %v150
    %152 = vst [vmem:[#allocation2 + $0x10] sm:$0x2] %v151
    %v153 = vld [vmem:[#allocation2] sm:$0xf]
    %v154 = vld [vmem:[#allocation2 + $0x4] sm:$0xf]
    %v155 = vld [vmem:[#allocation2 + $0x8] sm:$0xf]
    %v156 = vld [vmem:[#allocation2 + $0xc] sm:$0xf]
    %v157 = vld [vmem:[#allocation2 + $0x10] sm:$0x1]
    %v158 = vld [vmem:[#allocation4] sm:$0xf]
    %v159 = vld [vmem:[#allocation4 + $0x4] sm:$0xf]
    %v160 = vld [vmem:[#allocation4 + $0x8] sm:$0xf]
    %v161 = vld [vmem:[#allocation4 + $0xc] sm:$0xf]
    %v162 = vld [vmem:[#allocation4 + $0x10] sm:$0xf]
    %v163 = vld [vmem:[#allocation4 + $0x14] sm:$0xf]
    %v164 = vld [vmem:[#allocation4 + $0x18] sm:$0xf]
    %v165 = vld [vmem:[#allocation4 + $0x1c] sm:$0xf]
    %v166 = vld [vmem:[#allocation2 + $0x10] sm:$0x3]
    %s167 = scalar_lea.vmem [#allocation4], 32
    %v168 = vld [vmem:[%s167] sm:$0xf]
    %v169 = vld [vmem:[%s167 + $0x4] sm:$0xf]
    %v170 = vld [vmem:[%s167 + $0x8] sm:$0xf]
    %v171 = vld [vmem:[%s167 + $0xc] sm:$0xf]
    %v172 = vld [vmem:[%s167 + $0x10] sm:$0xf]
    %v173 = vld [vmem:[%s167 + $0x14] sm:$0xf]
    %v174 = vld [vmem:[%s167 + $0x18] sm:$0xf]
    %v175 = vld [vmem:[%s167 + $0x1c] sm:$0xf]
    %v181 = vunpack.c.l.b16 %v153
    %v182 = vunpack.c.l.b16 %v154
    %v183 = vunpack.c.l.b16 %v155
    %v184 = vunpack.c.l.b16 %v156
    %v185 = vunpack.c.l.b16 %v166
    %v186 = vpack.c.b16 %v182, %v181
    %v187 = vpack.c.b16 %v184, %v183
    %v188 = vpack.c.b16 %v185, %v185
    %vm189 = vsmask.f32 7424
    %v191 = vshrl.u32 %v186, 16
    %v193 = vshll.u32 %v186, 16
    %v195 = vrot.slane %v193, 1
    %v196 = vor.u32 %v191, %v195
    %v198 = vshll.u32 %v187, 16
    %v200 = vrot.slane %v198, 1
    %v201 = vsel %vm189, %v196, %v200
    %v202 = vshrl.u32 %v187, 16
    %v204 = vor.u32 %v202, %v200
    %v206 = vshll.u32 %v188, 16
    %v208 = vrot.slane %v206, 1
    %v209 = vsel %vm189, %v204, %v208
    %v210 = vshrl.u32 %v188, 16
    %v212 = vor.u32 %v210, %v208
    %v221 = vunpack.c.l.b16 %v168
    %v222 = vunpack.c.l.b16 %v169
    %v223 = vunpack.c.l.b16 %v170
    %v224 = vunpack.c.l.b16 %v171
    %v225 = vunpack.c.l.b16 %v172
    %v226 = vunpack.c.l.b16 %v173
    %v227 = vunpack.c.l.b16 %v174
    %v228 = vunpack.c.l.b16 %v175
    %v229 = vpack.c.b16 %v222, %v221
    %v230 = vpack.c.b16 %v224, %v223
    %v231 = vpack.c.b16 %v226, %v225
    %v232 = vpack.c.b16 %v228, %v227
    %vm237 = vcmask 523264
    %v239 = vsel %vm237, %v201, 0
    %v242 = vsel %vm237, %v209, 0
    %v245 = vsel %vm237, %v212, 0
    %247 = vmatprep.subr.bf16.mxu0 0
    %248 = vmatpush1.bf16.msra.mxu0 0
    %249 = vmatprep.subr.bf16.mxu0 0
    %250 = vmatpush1.bf16.msra.mxu0 0
    %251 = vmatprep.subr.bf16.mxu0 0
    %252 = vmatpush1.bf16.msra.mxu0 0
    %253 = vmatprep.subr.bf16.mxu0 0
    %254 = vmatpush1.bf16.msra.mxu0 0
    %255 = vmatprep.subr.bf16.mxu0 0
    %256 = vmatpush1.bf16.msra.mxu0 %v232
    %257 = vmatprep.subr.bf16.mxu0 0
    %258 = vmatpush1.bf16.msra.mxu0 %v231
    %259 = vmatprep.subr.bf16.mxu0 0
    %260 = vmatpush1.bf16.msra.mxu0 %v230
    %261 = vmatprep.subr.bf16.mxu0 0
    %262 = vmatpush1.bf16.msra.mxu0 %v229
    %263 = vmatprep.subr.bf16.mxu0 0
    %264 = vmatpush2.bf16.msra.mxu0 0
    %265 = vmatprep.subr.bf16.mxu0 0
    %266 = vmatpush2.bf16.msra.mxu0 0
    %267 = vmatprep.subr.bf16.mxu0 0
    %268 = vmatpush2.bf16.msra.mxu0 0
    %269 = vmatprep.subr.bf16.mxu0 0
    %270 = vmatpush2.bf16.msra.mxu0 0
    %271 = vmatprep.subr.bf16.mxu0 0
    %272 = vmatpush2.bf16.msra.mxu0 0
    %273 = vmatprep.subr.bf16.mxu0 0
    %274 = vmatpush2.bf16.msra.mxu0 0
    %275 = vmatprep.subr.bf16.mxu0 0
    %276 = vmatpush2.bf16.msra.mxu0 0
    %277 = vmatprep.subr.bf16.mxu0 0
    %278 = vmatpush2.bf16.msra.mxu0 0
    %279 = vmatprep.mubr.bf16.mxu0 0
    %280 = vmatmul.mubr.bf16.gmra.mxu0 %v239
    %v281 = vpop.f32.mrf.mxu0
    %v282 = vadd.f32 0.0, %v281
    %v283 = vpop.f32.mrf.mxu0
    %v284 = vpop.f32.mrf.mxu0
    %v285 = vadd.f32 0.0, %v284
    %v286 = vpop.f32.mrf.mxu0
    %287 = vmatprep.mubr.bf16.mxu0 0
    %288 = vmatmul.mubr.bf16.gmra.mxu0 %v242
    %v289 = vpop.f32.mrf.mxu0
    %v290 = vadd.f32 0.0, %v289
    %v291 = vpop.f32.mrf.mxu0
    %v292 = vpop.f32.mrf.mxu0
    %v293 = vadd.f32 0.0, %v292
    %v294 = vpop.f32.mrf.mxu0
    %295 = vmatprep.mubr.bf16.mxu0 0
    %296 = vmatmul.mubr.bf16.gmra.mxu0 %v245
    %v297 = vpop.f32.mrf.mxu0
    %v298 = vadd.f32 0.0, %v297
    %v299 = vpop.f32.mrf.mxu0
    %v300 = vpop.f32.mrf.mxu0
    %v301 = vpop.f32.mrf.mxu0
    %302 = vdwg.mxu0
    %v304 = vunpack.c.l.b16 %v157
    %v305 = vpack.c.b16 %v304, %v304
    %v314 = vunpack.c.l.b16 %v158
    %v315 = vunpack.c.l.b16 %v159
    %v316 = vunpack.c.l.b16 %v160
    %v317 = vunpack.c.l.b16 %v161
    %v318 = vunpack.c.l.b16 %v162
    %v319 = vunpack.c.l.b16 %v163
    %v320 = vunpack.c.l.b16 %v164
    %v321 = vunpack.c.l.b16 %v165
    %v322 = vpack.c.b16 %v315, %v314
    %v323 = vpack.c.b16 %v317, %v316
    %v324 = vpack.c.b16 %v319, %v318
    %v325 = vpack.c.b16 %v321, %v320
    %v330 = vsel %vm237, %v186, 0
    %v332 = vsel %vm237, %v187, 0
    %v335 = vsel %vm237, %v305, 0
    %337 = vmatprep.subr.bf16.mxu0 0
    %338 = vmatpush1.bf16.msra.mxu0 0
    %339 = vmatprep.subr.bf16.mxu0 0
    %340 = vmatpush1.bf16.msra.mxu0 0
    %341 = vmatprep.subr.bf16.mxu0 0
    %342 = vmatpush1.bf16.msra.mxu0 0
    %343 = vmatprep.subr.bf16.mxu0 0
    %344 = vmatpush1.bf16.msra.mxu0 0
    %345 = vmatprep.subr.bf16.mxu0 0
    %346 = vmatpush1.bf16.msra.mxu0 %v325
    %347 = vmatprep.subr.bf16.mxu0 0
    %348 = vmatpush1.bf16.msra.mxu0 %v324
    %349 = vmatprep.subr.bf16.mxu0 0
    %350 = vmatpush1.bf16.msra.mxu0 %v323
    %351 = vmatprep.subr.bf16.mxu0 0
    %352 = vmatpush1.bf16.msra.mxu0 %v322
    %353 = vmatprep.subr.bf16.mxu0 0
    %354 = vmatpush2.bf16.msra.mxu0 0
    %355 = vmatprep.subr.bf16.mxu0 0
    %356 = vmatpush2.bf16.msra.mxu0 0
    %357 = vmatprep.subr.bf16.mxu0 0
    %358 = vmatpush2.bf16.msra.mxu0 0
    %359 = vmatprep.subr.bf16.mxu0 0
    %360 = vmatpush2.bf16.msra.mxu0 0
    %361 = vmatprep.subr.bf16.mxu0 0
    %362 = vmatpush2.bf16.msra.mxu0 0
    %363 = vmatprep.subr.bf16.mxu0 0
    %364 = vmatpush2.bf16.msra.mxu0 0
    %365 = vmatprep.subr.bf16.mxu0 0
    %366 = vmatpush2.bf16.msra.mxu0 0
    %367 = vmatprep.subr.bf16.mxu0 0
    %368 = vmatpush2.bf16.msra.mxu0 0
    %369 = vmatprep.mubr.bf16.mxu0 0
    %370 = vmatmul.mubr.bf16.gmra.mxu0 %v330
    %v371 = vpop.f32.mrf.mxu0
    %v372 = vadd.f32 %v282, %v371
    %v373 = vpop.f32.mrf.mxu0
    %v374 = vpop.f32.mrf.mxu0
    %v375 = vadd.f32 %v285, %v374
    %v376 = vpop.f32.mrf.mxu0
    %377 = vmatprep.mubr.bf16.mxu0 0
    %378 = vmatmul.mubr.bf16.gmra.mxu0 %v332
    %v379 = vpop.f32.mrf.mxu0
    %v380 = vadd.f32 %v290, %v379
    %v381 = vpop.f32.mrf.mxu0
    %v382 = vpop.f32.mrf.mxu0
    %v383 = vadd.f32 %v293, %v382
    %v384 = vpop.f32.mrf.mxu0
    %385 = vmatprep.mubr.bf16.mxu0 0
    %386 = vmatmul.mubr.bf16.gmra.mxu0 %v335
    %v387 = vpop.f32.mrf.mxu0
    %v388 = vadd.f32 %v298, %v387
    %v389 = vpop.f32.mrf.mxu0
    %v390 = vpop.f32.mrf.mxu0
    %v391 = vpop.f32.mrf.mxu0
    %392 = vdwg.mxu0
    %v393 = vld [vmem:[#allocation2] sm:$0xe]
    %s394 = scalar_lea.vmem [#allocation4], 64
    %v395 = vld [vmem:[%s394] sm:$0xf]
    %v396 = vld [vmem:[%s394 + $0x4] sm:$0xf]
    %v397 = vld [vmem:[%s394 + $0x8] sm:$0xf]
    %v398 = vld [vmem:[%s394 + $0xc] sm:$0xf]
    %v399 = vld [vmem:[%s394 + $0x10] sm:$0xf]
    %v400 = vld [vmem:[%s394 + $0x14] sm:$0xf]
    %v401 = vld [vmem:[%s394 + $0x18] sm:$0xf]
    %v402 = vld [vmem:[%s394 + $0x1c] sm:$0xf]
    %v404 = vunpack.c.l.b16 %v393
    %v405 = vpack.c.b16 %v182, %v404
    %vm406 = vcmask 1046528
    %v407 = vrot.slane %v405, 1
    %v408 = vrot.slane %v187, 1
    %v409 = vsel %vm406, %v407, %v408
    %v410 = vrot.slane %v188, 1
    %v411 = vsel %vm406, %v408, %v410
    %v420 = vunpack.c.l.b16 %v395
    %v421 = vunpack.c.l.b16 %v396
    %v422 = vunpack.c.l.b16 %v397
    %v423 = vunpack.c.l.b16 %v398
    %v424 = vunpack.c.l.b16 %v399
    %v425 = vunpack.c.l.b16 %v400
    %v426 = vunpack.c.l.b16 %v401
    %v427 = vunpack.c.l.b16 %v402
    %v428 = vpack.c.b16 %v421, %v420
    %v429 = vpack.c.b16 %v423, %v422
    %v430 = vpack.c.b16 %v425, %v424
    %v431 = vpack.c.b16 %v427, %v426
    %v437 = vsel %vm237, %v409, 0
    %v440 = vsel %vm237, %v411, 0
    %v443 = vsel %vm237, %v410, 0
    %445 = vmatprep.subr.bf16.mxu0 0
    %446 = vmatpush1.bf16.msra.mxu0 0
    %447 = vmatprep.subr.bf16.mxu0 0
    %448 = vmatpush1.bf16.msra.mxu0 0
    %449 = vmatprep.subr.bf16.mxu0 0
    %450 = vmatpush1.bf16.msra.mxu0 0
    %451 = vmatprep.subr.bf16.mxu0 0
    %452 = vmatpush1.bf16.msra.mxu0 0
    %453 = vmatprep.subr.bf16.mxu0 0
    %454 = vmatpush1.bf16.msra.mxu0 %v431
    %455 = vmatprep.subr.bf16.mxu0 0
    %456 = vmatpush1.bf16.msra.mxu0 %v430
    %457 = vmatprep.subr.bf16.mxu0 0
    %458 = vmatpush1.bf16.msra.mxu0 %v429
    %459 = vmatprep.subr.bf16.mxu0 0
    %460 = vmatpush1.bf16.msra.mxu0 %v428
    %461 = vmatprep.subr.bf16.mxu0 0
    %462 = vmatpush2.bf16.msra.mxu0 0
    %463 = vmatprep.subr.bf16.mxu0 0
    %464 = vmatpush2.bf16.msra.mxu0 0
    %465 = vmatprep.subr.bf16.mxu0 0
    %466 = vmatpush2.bf16.msra.mxu0 0
    %467 = vmatprep.subr.bf16.mxu0 0
    %468 = vmatpush2.bf16.msra.mxu0 0
    %469 = vmatprep.subr.bf16.mxu0 0
    %470 = vmatpush2.bf16.msra.mxu0 0
    %471 = vmatprep.subr.bf16.mxu0 0
    %472 = vmatpush2.bf16.msra.mxu0 0
    %473 = vmatprep.subr.bf16.mxu0 0
    %474 = vmatpush2.bf16.msra.mxu0 0
    %475 = vmatprep.subr.bf16.mxu0 0
    %476 = vmatpush2.bf16.msra.mxu0 0
    %477 = vmatprep.mubr.bf16.mxu0 0
    %478 = vmatmul.mubr.bf16.gmra.mxu0 %v437
    %v479 = vpop.f32.mrf.mxu0
    %v480 = vadd.f32 0.0, %v479
    %v481 = vpop.f32.mrf.mxu0
    %v482 = vpop.f32.mrf.mxu0
    %v483 = vadd.f32 0.0, %v482
    %v484 = vpop.f32.mrf.mxu0
    %485 = vmatprep.mubr.bf16.mxu0 0
    %486 = vmatmul.mubr.bf16.gmra.mxu0 %v440
    %v487 = vpop.f32.mrf.mxu0
    %v488 = vadd.f32 0.0, %v487
    %v489 = vpop.f32.mrf.mxu0
    %v490 = vpop.f32.mrf.mxu0
    %v491 = vadd.f32 0.0, %v490
    %v492 = vpop.f32.mrf.mxu0
    %493 = vmatprep.mubr.bf16.mxu0 0
    %494 = vmatmul.mubr.bf16.gmra.mxu0 %v443
    %v495 = vpop.f32.mrf.mxu0
    %v496 = vadd.f32 0.0, %v495
    %v497 = vpop.f32.mrf.mxu0
    %v498 = vpop.f32.mrf.mxu0
    %v499 = vpop.f32.mrf.mxu0
    %500 = vdwg.mxu0
    %v501 = vadd.f32 %v372, %v480
    %v502 = vadd.f32 %v375, %v483
    %v503 = vadd.f32 %v380, %v488
    %v504 = vadd.f32 %v383, %v491
    %v505 = vadd.f32 %v388, %v496
    %v506 = vld [vmem:[%s2] sm:$0x1]
    %v508 = vlaneseq
    %v509 = vshrl.u32 %v508, 7
    %v510 = vsub.s32 0, %v509
    %v511 = vrot.slane %v506, %v510
    %v513 = vadd.f32 %v501, %v511
    %v514 = vadd.f32 %v502, %v511
    %v515 = vadd.f32 %v503, %v511
    %v516 = vadd.f32 %v504, %v511
    %v517 = vadd.f32 %v505, %v511
    %v518 = vmax.f32 %v513, 0.0
    %v519 = vmax.f32 %v514, 0.0
    %v520 = vmax.f32 %v515, 0.0
    %v521 = vmax.f32 %v516, 0.0
    %v522 = vmax.f32 %v517, 0.0
    %v523 = vld [vmem:[%s7] sm:$0xff]
    %v524 = vld [vmem:[%s7 + $0x8] sm:$0xff]
    %v525 = vld [vmem:[%s7 + $0x10] sm:$0xff]
    %v526 = vld [vmem:[%s7 + $0x18] sm:$0xff]
    %v527 = vld [vmem:[%s7 + $0x20] sm:$0x3]
    %529 = vset.pattern.permute.xlu0 0
    %530 = vperm.xlu0 %529, %v523
    %v531 = vpop.permute.xlu0 %530
    %534 = vset.pattern.permute.xlu0 0
    %535 = vperm.xlu0 %534, %v524
    %v536 = vpop.permute.xlu0 %535
    %539 = vset.pattern.permute.xlu0 0
    %540 = vperm.xlu0 %539, %v525
    %v541 = vpop.permute.xlu0 %540
    %544 = vset.pattern.permute.xlu0 0
    %545 = vperm.xlu0 %544, %v526
    %v546 = vpop.permute.xlu0 %545
    %549 = vset.pattern.permute.xlu0 0
    %550 = vperm.xlu0 %549, %v527
    %v551 = vpop.permute.xlu0 %550
    %v553 = vmul.f32 %v518, %v531
    %v554 = vmul.f32 %v519, %v536
    %v555 = vmul.f32 %v520, %v541
    %v556 = vmul.f32 %v521, %v546
    %v557 = vmul.f32 %v522, %v551
    %vm558 = vcmask 1040384
    %vm559 = vmand %vm558, %vm60
    %v560 = vld [vmem:[#allocation3] sm:$0x1]
    %v561 = vsel %vm559, 0, %v560
    %562 = vst [vmem:[#allocation3] sm:$0x1] %v561
    %vm563 = vcmask 1041409
    %vm564 = vmand %vm563, %vm138
    %v565 = vld [vmem:[#allocation3 + $0x10] sm:$0x2]
    %v566 = vsel %vm564, 0, %v565
    %567 = vst [vmem:[#allocation3 + $0x10] sm:$0x2] %v566
    %v568 = vpack.c.bf16 %v554, %v553
    %v569 = vpack.c.bf16 %v556, %v555
    %v570 = vpack.c.bf16 %v557, %v557
    %v574 = vunpack.c.l.b16 %v568
    %v575 = vunpack.c.h.b16 %v568
    %v576 = vunpack.c.l.b16 %v569
    %v577 = vunpack.c.h.b16 %v569
    %v578 = vunpack.c.l.b16 %v570
    %v579 = vpack.c.b16 %v574, %v574
    %v580 = vpack.c.b16 %v575, %v575
    %v581 = vpack.c.b16 %v576, %v576
    %v582 = vpack.c.b16 %v577, %v577
    %v583 = vpack.c.b16 %v578, %v578
    %v585 = vshrl.u32 %v579, 16
    %v587 = vrot.slane %v585, 7
    %v588 = vshll.u32 %v579, 16
    %v590 = vor.u32 %v587, %v588
    %v591 = vrot.slane %v587, 4
    %v593 = vshrl.u32 %v580, 16
    %v595 = vrot.slane %v593, 7
    %v596 = vshll.u32 %v580, 16
    %v598 = vor.u32 %v595, %v596
    %v599 = vsel %vm68, %v591, %v598
    %v600 = vrot.slane %v595, 4
    %v602 = vshrl.u32 %v581, 16
    %v604 = vrot.slane %v602, 7
    %v605 = vshll.u32 %v581, 16
    %v607 = vor.u32 %v604, %v605
    %v608 = vsel %vm68, %v600, %v607
    %v609 = vrot.slane %v604, 4
    %v611 = vshrl.u32 %v582, 16
    %v613 = vrot.slane %v611, 7
    %v614 = vshll.u32 %v582, 16
    %v616 = vor.u32 %v613, %v614
    %v617 = vsel %vm68, %v609, %v616
    %v618 = vrot.slane %v613, 4
    %v620 = vshrl.u32 %v583, 16
    %v622 = vrot.slane %v620, 7
    %v623 = vshll.u32 %v583, 16
    %v625 = vor.u32 %v622, %v623
    %v626 = vsel %vm68, %v618, %v625
    %vm632 = vcmask 1043456
    %vm633 = vmand %vm632, %vm90
    %v634 = vld [vmem:[#allocation3] sm:$0xf]
    %v635 = vsel %vm633, %v590, %v634
    %636 = vst [vmem:[#allocation3] sm:$0xf] %v635
    %637 = vst [vmem:[#allocation3 + $0x4] sm:$0xf] %v599
    %638 = vst [vmem:[#allocation3 + $0x8] sm:$0xf] %v608
    %639 = vst [vmem:[#allocation3 + $0xc] sm:$0xf] %v617
    %vm640 = vcmask 1041408
    %vm641 = vmand %vm640, %vm105
    %v642 = vld [vmem:[#allocation3 + $0x10] sm:$0x3]
    %v643 = vsel %vm641, %v626, %v642
    %644 = vst [vmem:[#allocation3 + $0x10] sm:$0x3] %v643
    %v645 = vld [vmem:[#allocation3] sm:$0xf]
    %v646 = vld [vmem:[#allocation3 + $0x4] sm:$0xf]
    %v647 = vld [vmem:[#allocation3 + $0x8] sm:$0xf]
    %v648 = vld [vmem:[#allocation3 + $0xc] sm:$0xf]
    %v649 = vld [vmem:[#allocation3 + $0x10] sm:$0x1]
    %v650 = vld [vmem:[#allocation7] sm:$0xf]
    %v651 = vld [vmem:[#allocation7 + $0x4] sm:$0xf]
    %v652 = vld [vmem:[#allocation7 + $0x8] sm:$0xf]
    %v653 = vld [vmem:[#allocation7 + $0xc] sm:$0xf]
    %v654 = vld [vmem:[#allocation7 + $0x10] sm:$0xf]
    %v655 = vld [vmem:[#allocation7 + $0x14] sm:$0xf]
    %v656 = vld [vmem:[#allocation7 + $0x18] sm:$0xf]
    %v657 = vld [vmem:[#allocation7 + $0x1c] sm:$0xf]
    %v658 = vld [vmem:[#allocation7 + $0x20] sm:$0xf]
    %v659 = vld [vmem:[#allocation7 + $0x24] sm:$0xf]
    %v660 = vld [vmem:[#allocation7 + $0x28] sm:$0xf]
    %v661 = vld [vmem:[#allocation7 + $0x2c] sm:$0xf]
    %v662 = vld [vmem:[#allocation7 + $0x30] sm:$0xf]
    %v663 = vld [vmem:[#allocation7 + $0x34] sm:$0xf]
    %v664 = vld [vmem:[#allocation7 + $0x38] sm:$0xf]
    %v665 = vld [vmem:[#allocation7 + $0x3c] sm:$0xf]
    %v666 = vld [vmem:[#allocation3 + $0x10] sm:$0x3]
    %s667 = scalar_lea.vmem [#allocation7], 64
    %v668 = vld [vmem:[%s667] sm:$0xf]
    %v669 = vld [vmem:[%s667 + $0x4] sm:$0xf]
    %v670 = vld [vmem:[%s667 + $0x8] sm:$0xf]
    %v671 = vld [vmem:[%s667 + $0xc] sm:$0xf]
    %v672 = vld [vmem:[%s667 + $0x10] sm:$0xf]
    %v673 = vld [vmem:[%s667 + $0x14] sm:$0xf]
    %v674 = vld [vmem:[%s667 + $0x18] sm:$0xf]
    %v675 = vld [vmem:[%s667 + $0x1c] sm:$0xf]
    %v676 = vld [vmem:[%s667 + $0x20] sm:$0xf]
    %v677 = vld [vmem:[%s667 + $0x24] sm:$0xf]
    %v678 = vld [vmem:[%s667 + $0x28] sm:$0xf]
    %v679 = vld [vmem:[%s667 + $0x2c] sm:$0xf]
    %v680 = vld [vmem:[%s667 + $0x30] sm:$0xf]
    %v681 = vld [vmem:[%s667 + $0x34] sm:$0xf]
    %v682 = vld [vmem:[%s667 + $0x38] sm:$0xf]
    %v683 = vld [vmem:[%s667 + $0x3c] sm:$0xf]
    %v689 = vunpack.c.l.b16 %v645
    %v690 = vunpack.c.l.b16 %v646
    %v691 = vunpack.c.l.b16 %v647
    %v692 = vunpack.c.l.b16 %v648
    %v693 = vunpack.c.l.b16 %v666
    %v694 = vpack.c.b16 %v690, %v689
    %v695 = vpack.c.b16 %v692, %v691
    %v696 = vpack.c.b16 %v693, %v693
    %v698 = vshrl.u32 %v694, 16
    %v700 = vshll.u32 %v694, 16
    %v702 = vrot.slane %v700, 1
    %v703 = vor.u32 %v698, %v702
    %v705 = vshll.u32 %v695, 16
    %v707 = vrot.slane %v705, 1
    %v708 = vsel %vm189, %v703, %v707
    %v709 = vshrl.u32 %v695, 16
    %v711 = vor.u32 %v709, %v707
    %v713 = vshll.u32 %v696, 16
    %v715 = vrot.slane %v713, 1
    %v716 = vsel %vm189, %v711, %v715
    %v717 = vshrl.u32 %v696, 16
    %v719 = vor.u32 %v717, %v715
    %v739 = vunpack.c.l.b16 %v668
    %v740 = vunpack.c.l.b16 %v669
    %v741 = vunpack.c.l.b16 %v670
    %v742 = vunpack.c.l.b16 %v671
    %v743 = vunpack.c.l.b16 %v672
    %v744 = vunpack.c.l.b16 %v673
    %v745 = vunpack.c.l.b16 %v674
    %v746 = vunpack.c.l.b16 %v675
    %v747 = vunpack.c.l.b16 %v676
    %v748 = vunpack.c.l.b16 %v677
    %v749 = vunpack.c.l.b16 %v678
    %v750 = vunpack.c.l.b16 %v679
    %v751 = vunpack.c.l.b16 %v680
    %v752 = vunpack.c.l.b16 %v681
    %v753 = vunpack.c.l.b16 %v682
    %v754 = vunpack.c.l.b16 %v683
    %v755 = vpack.c.b16 %v740, %v739
    %v756 = vpack.c.b16 %v742, %v741
    %v757 = vpack.c.b16 %v744, %v743
    %v758 = vpack.c.b16 %v746, %v745
    %v759 = vpack.c.b16 %v748, %v747
    %v760 = vpack.c.b16 %v750, %v749
    %v761 = vpack.c.b16 %v752, %v751
    %v762 = vpack.c.b16 %v754, %v753
    %771 = vmatprep.subr.bf16.mxu0 0
    %772 = vmatpush1.bf16.msra.mxu0 %v762
    %773 = vmatprep.subr.bf16.mxu0 0
    %774 = vmatpush1.bf16.msra.mxu0 %v761
    %775 = vmatprep.subr.bf16.mxu0 0
    %776 = vmatpush1.bf16.msra.mxu0 %v760
    %777 = vmatprep.subr.bf16.mxu0 0
    %778 = vmatpush1.bf16.msra.mxu0 %v759
    %779 = vmatprep.subr.bf16.mxu0 0
    %780 = vmatpush1.bf16.msra.mxu0 %v758
    %781 = vmatprep.subr.bf16.mxu0 0
    %782 = vmatpush1.bf16.msra.mxu0 %v757
    %783 = vmatprep.subr.bf16.mxu0 0
    %784 = vmatpush1.bf16.msra.mxu0 %v756
    %785 = vmatprep.subr.bf16.mxu0 0
    %786 = vmatpush1.bf16.msra.mxu0 %v755
    %787 = vmatprep.subr.bf16.mxu0 0
    %788 = vmatpush2.bf16.msra.mxu0 0
    %789 = vmatprep.subr.bf16.mxu0 0
    %790 = vmatpush2.bf16.msra.mxu0 0
    %791 = vmatprep.subr.bf16.mxu0 0
    %792 = vmatpush2.bf16.msra.mxu0 0
    %793 = vmatprep.subr.bf16.mxu0 0
    %794 = vmatpush2.bf16.msra.mxu0 0
    %795 = vmatprep.subr.bf16.mxu0 0
    %796 = vmatpush2.bf16.msra.mxu0 0
    %797 = vmatprep.subr.bf16.mxu0 0
    %798 = vmatpush2.bf16.msra.mxu0 0
    %799 = vmatprep.subr.bf16.mxu0 0
    %800 = vmatpush2.bf16.msra.mxu0 0
    %801 = vmatprep.subr.bf16.mxu0 0
    %802 = vmatpush2.bf16.msra.mxu0 0
    %803 = vmatprep.mubr.bf16.mxu0 0
    %804 = vmatmul.mubr.bf16.gmra.mxu0 %v708
    %v805 = vpop.f32.mrf.mxu0
    %v806 = vadd.f32 0.0, %v805
    %v807 = vpop.f32.mrf.mxu0
    %v808 = vpop.f32.mrf.mxu0
    %v809 = vadd.f32 0.0, %v808
    %v810 = vpop.f32.mrf.mxu0
    %811 = vmatprep.mubr.bf16.mxu0 0
    %812 = vmatmul.mubr.bf16.gmra.mxu0 %v716
    %v813 = vpop.f32.mrf.mxu0
    %v814 = vadd.f32 0.0, %v813
    %v815 = vpop.f32.mrf.mxu0
    %v816 = vpop.f32.mrf.mxu0
    %v817 = vadd.f32 0.0, %v816
    %v818 = vpop.f32.mrf.mxu0
    %819 = vmatprep.mubr.bf16.mxu0 0
    %820 = vmatmul.mubr.bf16.gmra.mxu0 %v719
    %v821 = vpop.f32.mrf.mxu0
    %v822 = vadd.f32 0.0, %v821
    %v823 = vpop.f32.mrf.mxu0
    %v824 = vpop.f32.mrf.mxu0
    %v825 = vpop.f32.mrf.mxu0
    %826 = vdwg.mxu0
    %v828 = vunpack.c.l.b16 %v649
    %v829 = vpack.c.b16 %v828, %v828
    %v849 = vunpack.c.l.b16 %v650
    %v850 = vunpack.c.l.b16 %v651
    %v851 = vunpack.c.l.b16 %v652
    %v852 = vunpack.c.l.b16 %v653
    %v853 = vunpack.c.l.b16 %v654
    %v854 = vunpack.c.l.b16 %v655
    %v855 = vunpack.c.l.b16 %v656
    %v856 = vunpack.c.l.b16 %v657
    %v857 = vunpack.c.l.b16 %v658
    %v858 = vunpack.c.l.b16 %v659
    %v859 = vunpack.c.l.b16 %v660
    %v860 = vunpack.c.l.b16 %v661
    %v861 = vunpack.c.l.b16 %v662
    %v862 = vunpack.c.l.b16 %v663
    %v863 = vunpack.c.l.b16 %v664
    %v864 = vunpack.c.l.b16 %v665
    %v865 = vpack.c.b16 %v850, %v849
    %v866 = vpack.c.b16 %v852, %v851
    %v867 = vpack.c.b16 %v854, %v853
    %v868 = vpack.c.b16 %v856, %v855
    %v869 = vpack.c.b16 %v858, %v857
    %v870 = vpack.c.b16 %v860, %v859
    %v871 = vpack.c.b16 %v862, %v861
    %v872 = vpack.c.b16 %v864, %v863
    %881 = vmatprep.subr.bf16.mxu0 0
    %882 = vmatpush1.bf16.msra.mxu0 %v872
    %883 = vmatprep.subr.bf16.mxu0 0
    %884 = vmatpush1.bf16.msra.mxu0 %v871
    %885 = vmatprep.subr.bf16.mxu0 0
    %886 = vmatpush1.bf16.msra.mxu0 %v870
    %887 = vmatprep.subr.bf16.mxu0 0
    %888 = vmatpush1.bf16.msra.mxu0 %v869
    %889 = vmatprep.subr.bf16.mxu0 0
    %890 = vmatpush1.bf16.msra.mxu0 %v868
    %891 = vmatprep.subr.bf16.mxu0 0
    %892 = vmatpush1.bf16.msra.mxu0 %v867
    %893 = vmatprep.subr.bf16.mxu0 0
    %894 = vmatpush1.bf16.msra.mxu0 %v866
    %895 = vmatprep.subr.bf16.mxu0 0
    %896 = vmatpush1.bf16.msra.mxu0 %v865
    %897 = vmatprep.subr.bf16.mxu0 0
    %898 = vmatpush2.bf16.msra.mxu0 0
    %899 = vmatprep.subr.bf16.mxu0 0
    %900 = vmatpush2.bf16.msra.mxu0 0
    %901 = vmatprep.subr.bf16.mxu0 0
    %902 = vmatpush2.bf16.msra.mxu0 0
    %903 = vmatprep.subr.bf16.mxu0 0
    %904 = vmatpush2.bf16.msra.mxu0 0
    %905 = vmatprep.subr.bf16.mxu0 0
    %906 = vmatpush2.bf16.msra.mxu0 0
    %907 = vmatprep.subr.bf16.mxu0 0
    %908 = vmatpush2.bf16.msra.mxu0 0
    %909 = vmatprep.subr.bf16.mxu0 0
    %910 = vmatpush2.bf16.msra.mxu0 0
    %911 = vmatprep.subr.bf16.mxu0 0
    %912 = vmatpush2.bf16.msra.mxu0 0
    %913 = vmatprep.mubr.bf16.mxu0 0
    %914 = vmatmul.mubr.bf16.gmra.mxu0 %v694
    %v915 = vpop.f32.mrf.mxu0
    %v916 = vadd.f32 %v806, %v915
    %v917 = vpop.f32.mrf.mxu0
    %v918 = vpop.f32.mrf.mxu0
    %v919 = vadd.f32 %v809, %v918
    %v920 = vpop.f32.mrf.mxu0
    %921 = vmatprep.mubr.bf16.mxu0 0
    %922 = vmatmul.mubr.bf16.gmra.mxu0 %v695
    %v923 = vpop.f32.mrf.mxu0
    %v924 = vadd.f32 %v814, %v923
    %v925 = vpop.f32.mrf.mxu0
    %v926 = vpop.f32.mrf.mxu0
    %v927 = vadd.f32 %v817, %v926
    %v928 = vpop.f32.mrf.mxu0
    %929 = vmatprep.mubr.bf16.mxu0 0
    %930 = vmatmul.mubr.bf16.gmra.mxu0 %v829
    %v931 = vpop.f32.mrf.mxu0
    %v932 = vadd.f32 %v822, %v931
    %v933 = vpop.f32.mrf.mxu0
    %v934 = vpop.f32.mrf.mxu0
    %v935 = vpop.f32.mrf.mxu0
    %936 = vdwg.mxu0
    %v937 = vld [vmem:[#allocation3] sm:$0xe]
    %s938 = scalar_lea.vmem [#allocation7], 128
    %v939 = vld [vmem:[%s938] sm:$0xf]
    %v940 = vld [vmem:[%s938 + $0x4] sm:$0xf]
    %v941 = vld [vmem:[%s938 + $0x8] sm:$0xf]
    %v942 = vld [vmem:[%s938 + $0xc] sm:$0xf]
    %v943 = vld [vmem:[%s938 + $0x10] sm:$0xf]
    %v944 = vld [vmem:[%s938 + $0x14] sm:$0xf]
    %v945 = vld [vmem:[%s938 + $0x18] sm:$0xf]
    %v946 = vld [vmem:[%s938 + $0x1c] sm:$0xf]
    %v947 = vld [vmem:[%s938 + $0x20] sm:$0xf]
    %v948 = vld [vmem:[%s938 + $0x24] sm:$0xf]
    %v949 = vld [vmem:[%s938 + $0x28] sm:$0xf]
    %v950 = vld [vmem:[%s938 + $0x2c] sm:$0xf]
    %v951 = vld [vmem:[%s938 + $0x30] sm:$0xf]
    %v952 = vld [vmem:[%s938 + $0x34] sm:$0xf]
    %v953 = vld [vmem:[%s938 + $0x38] sm:$0xf]
    %v954 = vld [vmem:[%s938 + $0x3c] sm:$0xf]
    %v956 = vunpack.c.l.b16 %v937
    %v957 = vpack.c.b16 %v690, %v956
    %v958 = vrot.slane %v957, 1
    %v959 = vrot.slane %v695, 1
    %v960 = vsel %vm406, %v958, %v959
    %v961 = vrot.slane %v696, 1
    %v962 = vsel %vm406, %v959, %v961
    %v982 = vunpack.c.l.b16 %v939
    %v983 = vunpack.c.l.b16 %v940
    %v984 = vunpack.c.l.b16 %v941
    %v985 = vunpack.c.l.b16 %v942
    %v986 = vunpack.c.l.b16 %v943
    %v987 = vunpack.c.l.b16 %v944
    %v988 = vunpack.c.l.b16 %v945
    %v989 = vunpack.c.l.b16 %v946
    %v990 = vunpack.c.l.b16 %v947
    %v991 = vunpack.c.l.b16 %v948
    %v992 = vunpack.c.l.b16 %v949
    %v993 = vunpack.c.l.b16 %v950
    %v994 = vunpack.c.l.b16 %v951
    %v995 = vunpack.c.l.b16 %v952
    %v996 = vunpack.c.l.b16 %v953
    %v997 = vunpack.c.l.b16 %v954
    %v998 = vpack.c.b16 %v983, %v982
    %v999 = vpack.c.b16 %v985, %v984
    %v1000 = vpack.c.b16 %v987, %v986
    %v1001 = vpack.c.b16 %v989, %v988
    %v1002 = vpack.c.b16 %v991, %v990
    %v1003 = vpack.c.b16 %v993, %v992
    %v1004 = vpack.c.b16 %v995, %v994
    %v1005 = vpack.c.b16 %v997, %v996
    %1014 = vmatprep.subr.bf16.mxu0 0
    %1015 = vmatpush1.bf16.msra.mxu0 %v1005
    %1016 = vmatprep.subr.bf16.mxu0 0
    %1017 = vmatpush1.bf16.msra.mxu0 %v1004
    %1018 = vmatprep.subr.bf16.mxu0 0
    %1019 = vmatpush1.bf16.msra.mxu0 %v1003
    %1020 = vmatprep.subr.bf16.mxu0 0
    %1021 = vmatpush1.bf16.msra.mxu0 %v1002
    %1022 = vmatprep.subr.bf16.mxu0 0
    %1023 = vmatpush1.bf16.msra.mxu0 %v1001
    %1024 = vmatprep.subr.bf16.mxu0 0
    %1025 = vmatpush1.bf16.msra.mxu0 %v1000
    %1026 = vmatprep.subr.bf16.mxu0 0
    %1027 = vmatpush1.bf16.msra.mxu0 %v999
    %1028 = vmatprep.subr.bf16.mxu0 0
    %1029 = vmatpush1.bf16.msra.mxu0 %v998
    %1030 = vmatprep.subr.bf16.mxu0 0
    %1031 = vmatpush2.bf16.msra.mxu0 0
    %1032 = vmatprep.subr.bf16.mxu0 0
    %1033 = vmatpush2.bf16.msra.mxu0 0
    %1034 = vmatprep.subr.bf16.mxu0 0
    %1035 = vmatpush2.bf16.msra.mxu0 0
    %1036 = vmatprep.subr.bf16.mxu0 0
    %1037 = vmatpush2.bf16.msra.mxu0 0
    %1038 = vmatprep.subr.bf16.mxu0 0
    %1039 = vmatpush2.bf16.msra.mxu0 0
    %1040 = vmatprep.subr.bf16.mxu0 0
    %1041 = vmatpush2.bf16.msra.mxu0 0
    %1042 = vmatprep.subr.bf16.mxu0 0
    %1043 = vmatpush2.bf16.msra.mxu0 0
    %1044 = vmatprep.subr.bf16.mxu0 0
    %1045 = vmatpush2.bf16.msra.mxu0 0
    %1046 = vmatprep.mubr.bf16.mxu0 0
    %1047 = vmatmul.mubr.bf16.gmra.mxu0 %v960
    %v1048 = vpop.f32.mrf.mxu0
    %v1049 = vadd.f32 0.0, %v1048
    %v1050 = vpop.f32.mrf.mxu0
    %v1051 = vpop.f32.mrf.mxu0
    %v1052 = vadd.f32 0.0, %v1051
    %v1053 = vpop.f32.mrf.mxu0
    %1054 = vmatprep.mubr.bf16.mxu0 0
    %1055 = vmatmul.mubr.bf16.gmra.mxu0 %v962
    %v1056 = vpop.f32.mrf.mxu0
    %v1057 = vadd.f32 0.0, %v1056
    %v1058 = vpop.f32.mrf.mxu0
    %v1059 = vpop.f32.mrf.mxu0
    %v1060 = vadd.f32 0.0, %v1059
    %v1061 = vpop.f32.mrf.mxu0
    %1062 = vmatprep.mubr.bf16.mxu0 0
    %1063 = vmatmul.mubr.bf16.gmra.mxu0 %v961
    %v1064 = vpop.f32.mrf.mxu0
    %v1065 = vadd.f32 0.0, %v1064
    %v1066 = vpop.f32.mrf.mxu0
    %v1067 = vpop.f32.mrf.mxu0
    %v1068 = vpop.f32.mrf.mxu0
    %1069 = vdwg.mxu0
    %v1070 = vadd.f32 %v916, %v1049
    %v1071 = vadd.f32 %v919, %v1052
    %v1072 = vadd.f32 %v924, %v1057
    %v1073 = vadd.f32 %v927, %v1060
    %v1074 = vadd.f32 %v932, %v1065
    %v1075 = vld [vmem:[%s4] sm:$0x1]
    %v1077 = vlaneseq
    %v1078 = vshrl.u32 %v1077, 7
    %v1079 = vsub.s32 0, %v1078
    %v1080 = vrot.slane %v1075, %v1079
    %v1082 = vadd.f32 %v1070, %v1080
    %v1083 = vadd.f32 %v1071, %v1080
    %v1084 = vadd.f32 %v1072, %v1080
    %v1085 = vadd.f32 %v1073, %v1080
    %v1086 = vadd.f32 %v1074, %v1080
    %v1087 = vld [vmem:[#allocation2] sm:$0xf]
    %v1088 = vld [vmem:[#allocation2 + $0x4] sm:$0xf]
    %v1089 = vld [vmem:[#allocation2 + $0x8] sm:$0xf]
    %v1090 = vld [vmem:[#allocation2 + $0xc] sm:$0xf]
    %v1091 = vld [vmem:[#allocation2 + $0x10] sm:$0x3]
    %v1092 = vld [vmem:[%s5] sm:$0xf]
    %v1093 = vld [vmem:[%s5 + $0x4] sm:$0xf]
    %v1094 = vld [vmem:[%s5 + $0x8] sm:$0xf]
    %v1095 = vld [vmem:[%s5 + $0xc] sm:$0xf]
    %v1096 = vld [vmem:[%s5 + $0x10] sm:$0xf]
    %v1097 = vld [vmem:[%s5 + $0x14] sm:$0xf]
    %v1098 = vld [vmem:[%s5 + $0x18] sm:$0xf]
    %v1099 = vld [vmem:[%s5 + $0x1c] sm:$0xf]
    %v1100 = vld [vmem:[%s6] sm:$0x1]
    %v1102 = vlaneseq
    %v1103 = vshrl.u32 %v1102, 7
    %v1104 = vsub.s32 0, %v1103
    %v1105 = vrot.slane %v1100, %v1104
    %v1112 = vunpack.c.l.b16 %v1087
    %v1113 = vunpack.c.l.b16 %v1088
    %v1114 = vunpack.c.l.b16 %v1089
    %v1115 = vunpack.c.l.b16 %v1090
    %v1116 = vunpack.c.l.b16 %v1091
    %v1117 = vpack.c.b16 %v1113, %v1112
    %v1118 = vpack.c.b16 %v1115, %v1114
    %v1119 = vpack.c.b16 %v1116, %v1116
    %v1121 = vshrl.u32 %v1117, 16
    %v1123 = vshll.u32 %v1117, 16
    %v1125 = vrot.slane %v1123, 1
    %v1126 = vor.u32 %v1121, %v1125
    %v1128 = vshll.u32 %v1118, 16
    %v1130 = vrot.slane %v1128, 1
    %v1131 = vsel %vm189, %v1126, %v1130
    %v1132 = vshrl.u32 %v1118, 16
    %v1134 = vor.u32 %v1132, %v1130
    %v1136 = vshll.u32 %v1119, 16
    %v1138 = vrot.slane %v1136, 1
    %v1139 = vsel %vm189, %v1134, %v1138
    %v1140 = vshrl.u32 %v1119, 16
    %v1142 = vor.u32 %v1140, %v1138
    %v1151 = vunpack.c.l.b16 %v1092
    %v1152 = vunpack.c.l.b16 %v1093
    %v1153 = vunpack.c.l.b16 %v1094
    %v1154 = vunpack.c.l.b16 %v1095
    %v1155 = vunpack.c.l.b16 %v1096
    %v1156 = vunpack.c.l.b16 %v1097
    %v1157 = vunpack.c.l.b16 %v1098
    %v1158 = vunpack.c.l.b16 %v1099
    %v1159 = vpack.c.b16 %v1152, %v1151
    %v1160 = vpack.c.b16 %v1154, %v1153
    %v1161 = vpack.c.b16 %v1156, %v1155
    %v1162 = vpack.c.b16 %v1158, %v1157
    %v1168 = vsel %vm237, %v1131, 0
    %v1171 = vsel %vm237, %v1139, 0
    %v1174 = vsel %vm237, %v1142, 0
    %1176 = vmatprep.subr.bf16.mxu0 0
    %1177 = vmatpush1.bf16.msra.mxu0 0
    %1178 = vmatprep.subr.bf16.mxu0 0
    %1179 = vmatpush1.bf16.msra.mxu0 0
    %1180 = vmatprep.subr.bf16.mxu0 0
    %1181 = vmatpush1.bf16.msra.mxu0 0
    %1182 = vmatprep.subr.bf16.mxu0 0
    %1183 = vmatpush1.bf16.msra.mxu0 0
    %1184 = vmatprep.subr.bf16.mxu0 0
    %1185 = vmatpush1.bf16.msra.mxu0 %v1162
    %1186 = vmatprep.subr.bf16.mxu0 0
    %1187 = vmatpush1.bf16.msra.mxu0 %v1161
    %1188 = vmatprep.subr.bf16.mxu0 0
    %1189 = vmatpush1.bf16.msra.mxu0 %v1160
    %1190 = vmatprep.subr.bf16.mxu0 0
    %1191 = vmatpush1.bf16.msra.mxu0 %v1159
    %1192 = vmatprep.subr.bf16.mxu0 0
    %1193 = vmatpush2.bf16.msra.mxu0 0
    %1194 = vmatprep.subr.bf16.mxu0 0
    %1195 = vmatpush2.bf16.msra.mxu0 0
    %1196 = vmatprep.subr.bf16.mxu0 0
    %1197 = vmatpush2.bf16.msra.mxu0 0
    %1198 = vmatprep.subr.bf16.mxu0 0
    %1199 = vmatpush2.bf16.msra.mxu0 0
    %1200 = vmatprep.subr.bf16.mxu0 0
    %1201 = vmatpush2.bf16.msra.mxu0 0
    %1202 = vmatprep.subr.bf16.mxu0 0
    %1203 = vmatpush2.bf16.msra.mxu0 0
    %1204 = vmatprep.subr.bf16.mxu0 0
    %1205 = vmatpush2.bf16.msra.mxu0 0
    %1206 = vmatprep.subr.bf16.mxu0 0
    %1207 = vmatpush2.bf16.msra.mxu0 0
    %1208 = vmatprep.mubr.bf16.mxu0 0
    %1209 = vmatmul.mubr.bf16.gmra.mxu0 %v1168
    %v1210 = vpop.f32.mrf.mxu0
    %v1211 = vadd.f32 %v1105, %v1210
    %v1212 = vpop.f32.mrf.mxu0
    %v1213 = vpop.f32.mrf.mxu0
    %v1214 = vadd.f32 %v1105, %v1213
    %v1215 = vpop.f32.mrf.mxu0
    %1216 = vmatprep.mubr.bf16.mxu0 0
    %1217 = vmatmul.mubr.bf16.gmra.mxu0 %v1171
    %v1218 = vpop.f32.mrf.mxu0
    %v1219 = vadd.f32 %v1105, %v1218
    %v1220 = vpop.f32.mrf.mxu0
    %v1221 = vpop.f32.mrf.mxu0
    %v1222 = vadd.f32 %v1105, %v1221
    %v1223 = vpop.f32.mrf.mxu0
    %1224 = vmatprep.mubr.bf16.mxu0 0
    %1225 = vmatmul.mubr.bf16.gmra.mxu0 %v1174
    %v1226 = vpop.f32.mrf.mxu0
    %v1227 = vadd.f32 %v1105, %v1226
    %v1228 = vpop.f32.mrf.mxu0
    %v1229 = vpop.f32.mrf.mxu0
    %v1230 = vpop.f32.mrf.mxu0
    %1231 = vdwg.mxu0
    %v1232 = vadd.f32 %v1082, %v1211
    %v1233 = vadd.f32 %v1083, %v1214
    %v1234 = vadd.f32 %v1084, %v1219
    %v1235 = vadd.f32 %v1085, %v1222
    %v1236 = vadd.f32 %v1086, %v1227
    %v1237 = vmax.f32 %v1232, 0.0
    %v1238 = vmax.f32 %v1233, 0.0
    %v1239 = vmax.f32 %v1234, 0.0
    %v1240 = vmax.f32 %v1235, 0.0
    %v1241 = vmax.f32 %v1236, 0.0
    %1242 = vst [vmem:[#allocation9] sm:$0xff] %v1237
    %1243 = vst [vmem:[#allocation9 + $0x8] sm:$0xff] %v1238
    %s1244 = scalar_lea.vmem [#allocation9], 16
    %1245 = vst [vmem:[%s1244 - $0x2] sm:$0xfc] %v1239
    %1246 = vst [vmem:[%s1244 + $0x6] sm:$0xff] %v1240
    %1247 = vst [vmem:[%s1244 + $0xe] sm:$0x3] %v1241
    // Predicated region
    $region42: #{tpu_custom_call.1} parent=1 // pred_check
      _
    $region43: #{tpu_custom_call.1} parent=1 // pred_check_branch
      %1249 = sbr.rel (0) target = $region45
    $region44: #{tpu_custom_call.1} parent=1 // pred_region
      %s1251 = ssub.s32 512, 512
      %1252 = vsyncadd [#allocation6], %s1251
      %s1253 = sshll.u32 [#allocation9], 4
      %s1254 = int_to_ptr.vmem [resolvable:$true] %s1253
      %1259 = dma.vmem_to_hbm [thread:$0]  %s1254, 512, %s8, [#allocation6], 128, 128, 8
    $region45: #{tpu_custom_call.1} parent=1 // pred_fallthru
      _
    // Predicated region
    $region46: #{tpu_custom_call.1} parent=1 // pred_check
      _
    $region47: #{tpu_custom_call.1} parent=1 // pred_check_branch
      %1261 = sbr.rel (0) target = $region49
    $region48: #{tpu_custom_call.1} parent=1 // pred_region
      %1262 = dma.done [#allocation6], 512
    $region49: #{tpu_custom_call.1} parent=1 // pred_fallthru
      _
    %1263 = vsyncpa [#allocation5], 1
    %1264 = vsyncpa [#allocation8], 1
    %1265 = vsyncpa [#allocation6], 1

</llo_original>
